<compile_context>
chip_gen: v6e
topology: v6e:2x2x1
jax: 0.10.0
libtpu: 0.0.40
codegen_flags: <defaults>
</compile_context>

<pallas_src>
import jax
import jax.numpy as jnp
from jax.experimental import pallas as pl
from jax.experimental.pallas import tpu as pltpu


def _obs_feat_kernel(x_ref, w1_ref, b1_ref, w2_ref, b2_ref, w3_ref, b3_ref,
                     o_ref, acc_ref):
    # grid = (B, n_out // tile_n, L // tile_l); axis 2 is the max-pool reduction.
    lk = pl.program_id(2)

    @pl.when(lk == 0)
    def _():
        acc_ref[...] = jnp.full_like(acc_ref, -jnp.inf)

    x = x_ref[0]                      # (3, TL) f32, lane-dense along L (NCL layout)
    w1 = w1_ref[...]                  # (64, 3) f32

    # Layer 1 (Cin=3): three VPU broadcast-FMAs; avoids a K=3 MXU matmul and
    # any transpose of the input tile.
    h = (w1[:, 0:1] * x[0:1, :]
         + w1[:, 1:2] * x[1:2, :]
         + w1[:, 2:3] * x[2:3, :]) + b1_ref[...]           # (64, TL) f32
    h = jnp.maximum(h, 0.0)

    # Layer 2: (256, 64) @ (64, TL) on the MXU, bf16 operands, f32 accumulation.
    h = jnp.dot(w2_ref[...], h.astype(jnp.bfloat16),
                preferred_element_type=jnp.float32) + b2_ref[...]
    h = jnp.maximum(h, 0.0)                                 # (256, TL) f32

    # Layer 3: (TN, 256) @ (256, TL), bf16 operands, f32 accumulation, no relu.
    h = jnp.dot(w3_ref[...], h.astype(jnp.bfloat16),
                preferred_element_type=jnp.float32) + b3_ref[...]   # (TN, TL) f32

    # Running global max over the L tiles.
    acc_ref[...] = jnp.maximum(acc_ref[...], h.max(axis=-1, keepdims=True))

    @pl.when(lk == pl.num_programs(2) - 1)
    def _():
        o_ref[...] = acc_ref[...][None].astype(o_ref.dtype)   # (1, TN, 1)


def obs_feat_kitti(x_ncl, params, *, tile_l=512, tile_n=512,
                   vmem_limit_bytes=32 * 1024 * 1024):
    """x_ncl: (B, 3, L) float32 (PyTorch NCL layout). Returns (B, n_out).

    params = (w1, b1, w2, b2, w3, b3) in channels-first layout:
      w_i = conv_i.weight[:, :, 0]  -> (out, in)
      b_i = conv_i.bias[:, None]    -> (out, 1)
    """
    w1, b1, w2, b2, w3, b3 = params
    B, C, L = x_ncl.shape
    assert C == 3, "the input size must be <Bx3xL>"
    n_out = w3.shape[0]

    # ---- choose an MXU/lane-friendly L tile -------------------------------
    if tile_l >= L:
        tile_l = L                       # single tile; block == full dim is legal
    else:
        tile_l = max(128, (tile_l // 128) * 128)   # lane-dense multiple of 128
        if L % tile_l != 0:
            # Pad L by replicating the last point ("edge"). Duplicated real
            # points cannot change the global max, so no in-kernel masking.
            pad = tile_l - (L % tile_l)
            x_ncl = jnp.pad(x_ncl, ((0, 0), (0, 0), (0, pad)), mode="edge")
            L = L + pad

    # ---- n_out tiling: second parallel grid axis (v7x dual TensorCore) ----
    if tile_n > n_out or (n_out % tile_n) != 0 or (tile_n % 16) != 0:
        tile_n = n_out

    grid = (B, n_out // tile_n, L // tile_l)

    # bf16 weights for the MXU layers; layer-1 weights/biases stay f32 (VPU).
    w2b = w2.astype(jnp.bfloat16)
    w3b = w3.astype(jnp.bfloat16)

    const = lambda shape: pl.BlockSpec(shape, lambda b, j, lk: (0, 0))

    out = pl.pallas_call(
        _obs_feat_kernel,
        out_shape=jax.ShapeDtypeStruct((B, n_out, 1), jnp.float32),
        grid_spec=pltpu.PrefetchScalarGridSpec(
            num_scalar_prefetch=0,
            grid=grid,
            in_specs=[
                # Input stays in PyTorch NCL layout; block lane-dense along L.
                pl.BlockSpec((1, 3, tile_l), lambda b, j, lk: (b, 0, lk)),
                const((64, 3)),       # w1 (f32, VPU path)
                const((64, 1)),       # b1
                const((256, 64)),     # w2 (bf16)
                const((256, 1)),      # b2
                pl.BlockSpec((tile_n, 256), lambda b, j, lk: (j, 0)),  # w3 (bf16)
                pl.BlockSpec((tile_n, 1),   lambda b, j, lk: (j, 0)),  # b3
            ],
            out_specs=pl.BlockSpec((1, tile_n, 1), lambda b, j, lk: (b, j, 0)),
            scratch_shapes=[pltpu.VMEM((tile_n, 1), jnp.float32)],
        ),
        compiler_params=pltpu.CompilerParams(
            dimension_semantics=("parallel", "parallel", "arbitrary"),
            vmem_limit_bytes=vmem_limit_bytes),
    )(x_ncl, w1, b1, w2b, b2, w3b, b3)

    return out.reshape(B, n_out)


def init_params(key, n_out):
    """Deterministic init matching PyTorch Conv1d default U[-1/sqrt(fan_in), +]."""
    ks = jax.random.split(key, 6)

    def uni(k, shape, fan_in):
        bound = 1.0 / jnp.sqrt(fan_in)
        return jax.random.uniform(k, shape, jnp.float32, -bound, bound)

    w1 = uni(ks[0], (64, 3), 3.0)
    b1 = uni(ks[1], (64, 1), 3.0)
    w2 = uni(ks[2], (256, 64), 64.0)
    b2 = uni(ks[3], (256, 1), 64.0)
    w3 = uni(ks[4], (n_out, 256), 256.0)
    b3 = uni(ks[5], (n_out, 1), 256.0)
    return (w1, b1, w2, b2, w3, b3)


def obs_feat_kitti_ref(x_ncl, params, *, bf16_matmul=False):
    """Plain-JAX reference. bf16_matmul=True mimics the kernel's MXU casts."""
    w1, b1, w2, b2, w3, b3 = params
    cast = (lambda a: a.astype(jnp.bfloat16)) if bf16_matmul else (lambda a: a)
    h = jax.nn.relu(jnp.einsum("oc,bcl->bol", w1, x_ncl) + b1[None])     # layer 1 (f32)
    h = jax.nn.relu(jnp.einsum("oc,bcl->bol", cast(w2), cast(h),
                               preferred_element_type=jnp.float32) + b2[None])
    h = jnp.einsum("oc,bcl->bol", cast(w3), cast(h),
                   preferred_element_type=jnp.float32) + b3[None]
    return jnp.max(h, axis=-1)                                            # (B, n_out)


if __name__ == "__main__":
    B = 2
    L = 1024       # n_points
    N_OUT = 512    # module default is 1024; smaller for the example

    key = jax.random.PRNGKey(0)
    k_x, k_p = jax.random.split(key)

    x = jax.random.normal(k_x, (B, 3, L), jnp.float32)   # PyTorch NCL input
    params = init_params(k_p, N_OUT)

    out = obs_feat_kitti(x, params, tile_l=512, tile_n=256)
    out = jax.block_until_ready(out)
    assert out.shape == (B, N_OUT)

    # Tight check vs a reference that mimics the kernel's bf16 matmul operands.
    ref_bf16 = obs_feat_kitti_ref(x, params, bf16_matmul=True)
    assert jnp.allclose(out, ref_bf16, atol=1e-2, rtol=1e-2), \
        "mismatch vs bf16-matched reference"

    # Loose check vs the full-f32 reference (PyTorch-equivalent semantics).
    ref_f32 = obs_feat_kitti_ref(x, params, bf16_matmul=False)
    assert jnp.allclose(out, ref_f32, atol=5e-2, rtol=5e-2), \
        "mismatch vs f32 reference"

    print("KERNEL_OK")
</pallas_src>

<mosaic_0001>
module attributes {stable_mosaic.version = 11 : i64} {
  func.func @_obs_feat_kernel(%arg0: i32, %arg1: i32, %arg2: i32, %arg3: memref<1x3x512xf32, #tpu.memory_space<vmem>>, %arg4: memref<64x3xf32, #tpu.memory_space<vmem>>, %arg5: memref<64x1xf32, #tpu.memory_space<vmem>>, %arg6: memref<256x64xbf16, #tpu.memory_space<vmem>>, %arg7: memref<256x1xf32, #tpu.memory_space<vmem>>, %arg8: memref<256x256xbf16, #tpu.memory_space<vmem>>, %arg9: memref<256x1xf32, #tpu.memory_space<vmem>>, %arg10: memref<1x256x1xf32, #tpu.memory_space<vmem>>, %arg11: memref<256x1xf32, #tpu.memory_space<vmem>>) attributes {dimension_semantics = [#tpu.dimension_semantics<parallel>, #tpu.dimension_semantics<parallel>, #tpu.dimension_semantics<arbitrary>], iteration_bounds = array<i64: 2, 2, 2>, scalar_prefetch = 0 : i64, scratch_operands = 1 : i64, tpu.core_type = #tpu.core_type<tc>, window_params = [{transform_indices = @transform_0, window_bounds = array<i64: 1, 3, 512>}, {pipeline_mode = #tpu.pipeline_mode<synchronous>, transform_indices = @transform_1, window_bounds = array<i64: 64, 3>}, {pipeline_mode = #tpu.pipeline_mode<synchronous>, transform_indices = @transform_2, window_bounds = array<i64: 64, 1>}, {pipeline_mode = #tpu.pipeline_mode<synchronous>, transform_indices = @transform_3, window_bounds = array<i64: 256, 64>}, {pipeline_mode = #tpu.pipeline_mode<synchronous>, transform_indices = @transform_4, window_bounds = array<i64: 256, 1>}, {transform_indices = @transform_5, window_bounds = array<i64: 256, 256>}, {transform_indices = @transform_6, window_bounds = array<i64: 256, 1>}, {transform_indices = @transform_7, window_bounds = array<i64: 1, 256, 1>}]} {
    %c0_i32 = arith.constant 0 : i32
    %0 = arith.cmpi eq, %arg2, %c0_i32 : i32
    %1 = arith.extui %0 : i1 to i32
    %c0_i32_0 = arith.constant 0 : i32
    %2 = arith.cmpi ne, %1, %c0_i32_0 : i32
    scf.if %2 {
      %cst_24 = arith.constant 0xFF800000 : f32
      %50 = vector.broadcast %cst_24 : f32 to vector<256x1xf32>
      %c0_25 = arith.constant 0 : index
      %c0_26 = arith.constant 0 : index
      %51 = vector.load %arg11[%c0_25, %c0_26] : memref<256x1xf32, #tpu.memory_space<vmem>>, vector<256x1xf32>
      tpu.vector_store %arg11[%c0_25, %c0_26], %50 {strides = array<i32>} : memref<256x1xf32, #tpu.memory_space<vmem>>, vector<256x1xf32>,
    } else {
    }
    %c0 = arith.constant 0 : index
    %c0_1 = arith.constant 0 : index
    %c0_2 = arith.constant 0 : index
    %3 = vector.load %arg3[%c0, %c0_1, %c0_2] : memref<1x3x512xf32, #tpu.memory_space<vmem>>, vector<1x3x512xf32>
    %4 = vector.shape_cast %3 : vector<1x3x512xf32> to vector<3x512xf32>
    %c0_3 = arith.constant 0 : index
    %c0_4 = arith.constant 0 : index
    %5 = vector.load %arg4[%c0_3, %c0_4] : memref<64x3xf32, #tpu.memory_space<vmem>>, vector<64x3xf32>
    %6 = vector.extract_strided_slice %5 {offsets = [0, 0], sizes = [64, 1], strides = [1, 1]} : vector<64x3xf32> to vector<64x1xf32>
    %7 = vector.extract_strided_slice %4 {offsets = [0, 0], sizes = [1, 512], strides = [1, 1]} : vector<3x512xf32> to vector<1x512xf32>
    %8 = vector.broadcast %6 : vector<64x1xf32> to vector<64x512xf32>
    %9 = vector.broadcast %7 : vector<1x512xf32> to vector<64x512xf32>
    %10 = arith.mulf %8, %9 : vector<64x512xf32>
    %11 = vector.extract_strided_slice %5 {offsets = [0, 1], sizes = [64, 1], strides = [1, 1]} : vector<64x3xf32> to vector<64x1xf32>
    %12 = vector.extract_strided_slice %4 {offsets = [1, 0], sizes = [1, 512], strides = [1, 1]} : vector<3x512xf32> to vector<1x512xf32>
    %13 = vector.broadcast %11 : vector<64x1xf32> to vector<64x512xf32>
    %14 = vector.broadcast %12 : vector<1x512xf32> to vector<64x512xf32>
    %15 = arith.mulf %13, %14 : vector<64x512xf32>
    %16 = arith.addf %10, %15 : vector<64x512xf32>
    %17 = vector.extract_strided_slice %5 {offsets = [0, 2], sizes = [64, 1], strides = [1, 1]} : vector<64x3xf32> to vector<64x1xf32>
    %18 = vector.extract_strided_slice %4 {offsets = [2, 0], sizes = [1, 512], strides = [1, 1]} : vector<3x512xf32> to vector<1x512xf32>
    %19 = vector.broadcast %17 : vector<64x1xf32> to vector<64x512xf32>
    %20 = vector.broadcast %18 : vector<1x512xf32> to vector<64x512xf32>
    %21 = arith.mulf %19, %20 : vector<64x512xf32>
    %22 = arith.addf %16, %21 : vector<64x512xf32>
    %c0_5 = arith.constant 0 : index
    %c0_6 = arith.constant 0 : index
    %23 = vector.load %arg5[%c0_5, %c0_6] : memref<64x1xf32, #tpu.memory_space<vmem>>, vector<64x1xf32>
    %24 = vector.broadcast %23 : vector<64x1xf32> to vector<64x512xf32>
    %25 = arith.addf %22, %24 : vector<64x512xf32>
    %cst = arith.constant 0.000000e+00 : f32
    %26 = vector.broadcast %cst : f32 to vector<64x512xf32>
    %27 = arith.maximumf %25, %26 : vector<64x512xf32>
    %c0_7 = arith.constant 0 : index
    %c0_8 = arith.constant 0 : index
    %28 = vector.load %arg6[%c0_7, %c0_8] : memref<256x64xbf16, #tpu.memory_space<vmem>>, vector<256x64xbf16>
    %29 = arith.truncf %27 : vector<64x512xf32> to vector<64x512xbf16>
    %cst_9 = arith.constant dense<0.000000e+00> : vector<256x512xf32>
    %30 = tpu.matmul %28, %29, %cst_9 {dimension_numbers = #tpu.dot_dimension_numbers<[1], [0], [0], [1], [0, 0, 1, 1], [], []>} : vector<256x64xbf16>, vector<64x512xbf16>, vector<256x512xf32> -> vector<256x512xf32>
    %c0_10 = arith.constant 0 : index
    %c0_11 = arith.constant 0 : index
    %31 = vector.load %arg7[%c0_10, %c0_11] : memref<256x1xf32, #tpu.memory_space<vmem>>, vector<256x1xf32>
    %32 = vector.broadcast %31 : vector<256x1xf32> to vector<256x512xf32>
    %33 = arith.addf %30, %32 : vector<256x512xf32>
    %cst_12 = arith.constant 0.000000e+00 : f32
    %34 = vector.broadcast %cst_12 : f32 to vector<256x512xf32>
    %35 = arith.maximumf %33, %34 : vector<256x512xf32>
    %c0_13 = arith.constant 0 : index
    %c0_14 = arith.constant 0 : index
    %36 = vector.load %arg8[%c0_13, %c0_14] : memref<256x256xbf16, #tpu.memory_space<vmem>>, vector<256x256xbf16>
    %37 = arith.truncf %35 : vector<256x512xf32> to vector<256x512xbf16>
    %cst_15 = arith.constant dense<0.000000e+00> : vector<256x512xf32>
    %38 = tpu.matmul %36, %37, %cst_15 {dimension_numbers = #tpu.dot_dimension_numbers<[1], [0], [0], [1], [0, 0, 1, 1], [], []>} : vector<256x256xbf16>, vector<256x512xbf16>, vector<256x512xf32> -> vector<256x512xf32>
    %c0_16 = arith.constant 0 : index
    %c0_17 = arith.constant 0 : index
    %39 = vector.load %arg9[%c0_16, %c0_17] : memref<256x1xf32, #tpu.memory_space<vmem>>, vector<256x1xf32>
    %40 = vector.broadcast %39 : vector<256x1xf32> to vector<256x512xf32>
    %41 = arith.addf %38, %40 : vector<256x512xf32>
    %c0_18 = arith.constant 0 : index
    %c0_19 = arith.constant 0 : index
    %42 = vector.load %arg11[%c0_18, %c0_19] : memref<256x1xf32, #tpu.memory_space<vmem>>, vector<256x1xf32>
    %cst_20 = arith.constant dense<0xFF800000> : vector<256xf32>
    %43 = vector.multi_reduction <maximumf>, %41, %cst_20 [1] : vector<256x512xf32> to vector<256xf32>
    %44 = vector.shape_cast %43 : vector<256xf32> to vector<256x1xf32>
    %45 = arith.maximumf %42, %44 : vector<256x1xf32>
    %c0_21 = arith.constant 0 : index
    %c0_22 = arith.constant 0 : index
    %46 = vector.load %arg11[%c0_21, %c0_22] : memref<256x1xf32, #tpu.memory_space<vmem>>, vector<256x1xf32>
    tpu.vector_store %arg11[%c0_21, %c0_22], %45 {strides = array<i32>} : memref<256x1xf32, #tpu.memory_space<vmem>>, vector<256x1xf32>,
    %c1_i32 = arith.constant 1 : i32
    %47 = arith.cmpi eq, %arg2, %c1_i32 : i32
    %48 = arith.extui %47 : i1 to i32
    %c0_i32_23 = arith.constant 0 : i32
    %49 = arith.cmpi ne, %48, %c0_i32_23 : i32
    scf.if %49 {
      %c0_24 = arith.constant 0 : index
      %c0_25 = arith.constant 0 : index
      %50 = vector.load %arg11[%c0_24, %c0_25] : memref<256x1xf32, #tpu.memory_space<vmem>>, vector<256x1xf32>
      %51 = vector.shape_cast %50 : vector<256x1xf32> to vector<1x256x1xf32>
      %c0_26 = arith.constant 0 : index
      %c0_27 = arith.constant 0 : index
      %c0_28 = arith.constant 0 : index
      %52 = vector.load %arg10[%c0_26, %c0_27, %c0_28] : memref<1x256x1xf32, #tpu.memory_space<vmem>>, vector<1x256x1xf32>
      tpu.vector_store %arg10[%c0_26, %c0_27, %c0_28], %51 {strides = array<i32>} : memref<1x256x1xf32, #tpu.memory_space<vmem>>, vector<1x256x1xf32>,
    } else {
    }
    return
  }
  func.func @transform_0(%arg0: i32, %arg1: i32, %arg2: i32) -> (i32, i32, i32) {
    %c0_i32 = arith.constant 0 : i32
    %c0_i32_0 = arith.constant 0 : i32
    return %arg0, %c0_i32, %arg2 : i32, i32, i32
  }
  func.func @transform_1(%arg0: i32, %arg1: i32, %arg2: i32) -> (i32, i32) {
    %c0_i32 = arith.constant 0 : i32
    %c0_i32_0 = arith.constant 0 : i32
    %c0_i32_1 = arith.constant 0 : i32
    return %c0_i32, %c0_i32_0 : i32, i32
  }
  func.func @transform_2(%arg0: i32, %arg1: i32, %arg2: i32) -> (i32, i32) {
    %c0_i32 = arith.constant 0 : i32
    %c0_i32_0 = arith.constant 0 : i32
    %c0_i32_1 = arith.constant 0 : i32
    return %c0_i32, %c0_i32_0 : i32, i32
  }
  func.func @transform_3(%arg0: i32, %arg1: i32, %arg2: i32) -> (i32, i32) {
    %c0_i32 = arith.constant 0 : i32
    %c0_i32_0 = arith.constant 0 : i32
    %c0_i32_1 = arith.constant 0 : i32
    return %c0_i32, %c0_i32_0 : i32, i32
  }
  func.func @transform_4(%arg0: i32, %arg1: i32, %arg2: i32) -> (i32, i32) {
    %c0_i32 = arith.constant 0 : i32
    %c0_i32_0 = arith.constant 0 : i32
    %c0_i32_1 = arith.constant 0 : i32
    return %c0_i32, %c0_i32_0 : i32, i32
  }
  func.func @transform_5(%arg0: i32, %arg1: i32, %arg2: i32) -> (i32, i32) {
    %c0_i32 = arith.constant 0 : i32
    %c0_i32_0 = arith.constant 0 : i32
    return %arg1, %c0_i32 : i32, i32
  }
  func.func @transform_6(%arg0: i32, %arg1: i32, %arg2: i32) -> (i32, i32) {
    %c0_i32 = arith.constant 0 : i32
    %c0_i32_0 = arith.constant 0 : i32
    return %arg1, %c0_i32 : i32, i32
  }
  func.func @transform_7(%arg0: i32, %arg1: i32, %arg2: i32) -> (i32, i32, i32) {
    %c0_i32 = arith.constant 0 : i32
    %c0_i32_0 = arith.constant 0 : i32
    return %arg0, %arg1, %c0_i32 : i32, i32, i32
  }
}

</mosaic_0001>

<llo_original>
// kernel: tpu_custom_call.1
$region0: #{tpu_custom_call.1}
  #allocation0 [shape = 'u32[]', space=smem, size = 0x4, offset = 0x4, fixed_abs, tag = 'smem constant byte address 0x4 - core index']
  #allocation1 [shape = 'u32[144,128]{1,0:T(1,128)}', space=vmem, size = 0x12000, scoped, tag = 'internal scratch']
  #allocation2 [shape = 'f32[256,1]{1,0:T(8,128)}', space=vmem, size = 0x20000, scoped, tag = 'scratch operand']
  %s0 = inlined_call_operand.vmem [shape: f32[2,3,1024], index: 0, kind: input, shape index: {}]
  %s1 = inlined_call_operand.vmem [shape: f32[64,3], index: 1, kind: input, shape index: {}]
  %s2 = inlined_call_operand.vmem [shape: f32[64,1], index: 2, kind: input, shape index: {}]
  %s3 = inlined_call_operand.vmem [shape: bf16[256,64], index: 3, kind: input, shape index: {}]
  %s4 = inlined_call_operand.vmem [shape: f32[256,1], index: 4, kind: input, shape index: {}]
  %s5 = inlined_call_operand.vmem [shape: bf16[512,256], index: 5, kind: input, shape index: {}]
  %s6 = inlined_call_operand.vmem [shape: f32[512,1], index: 6, kind: input, shape index: {}]
  %s7 = inlined_call_operand.vmem [shape: f32[2,512,1], index: 7, kind: output, shape index: {}]
  %s8 = sld [smem:[#allocation0]]
  $region69: #{tpu_custom_call.1} parent=0
    _
  %s10 = ssub.s32 1, %s8
  %s11 = scalar_select 0, %s10, %s8
  loop: start=0, step=1, limit=10
  $region2: #{tpu_custom_call.1} parent=0 // loop_pre_header
    _
  $region3: #{tpu_custom_call.1} parent=0 // loop_header
    %s13 = sphi 0, %s17
    %p14 = scmp.ge.s32.totalorder %s13, 10
    %s20 = sphi 0, %s39
    %s21 = sphi 0, %s35
    %s22 = sphi 0, %s31
    %s23 = sphi 0, %s20
    %s24 = sphi 0, %s21
    %s25 = sphi 0, %s22
    %s26 = sphi 0, %s23
    %s27 = sphi 0, %s24
    %s28 = sphi 0, %s25
    %s44 = sphi 0, %s46
    %s47 = sphi 0, %s44
    %s48 = sphi 0, %s47
    %s64 = sphi 0, %s48
    %s68 = sphi 0, %s68
    %s70 = sphi 0, %s68
    %s71 = sphi 0, %s70
    %s85 = sphi 0, %s71
    %s89 = sphi 0, %s89
    %s91 = sphi 0, %s89
    %s92 = sphi 0, %s91
    %s106 = sphi 0, %s92
    %s110 = sphi 0, %s110
    %s112 = sphi 0, %s110
    %s113 = sphi 0, %s112
    %s127 = sphi 0, %s113
    %s131 = sphi 0, %s131
    %s133 = sphi 0, %s131
    %s134 = sphi 0, %s133
    %s148 = sphi 0, %s134
    %s154 = sphi 0, %s156
    %s157 = sphi 0, %s154
    %s158 = sphi 0, %s157
    %s174 = sphi 0, %s158
    %s180 = sphi 0, %s182
    %s183 = sphi 0, %s180
    %s184 = sphi 0, %s183
    %s200 = sphi 0, %s184
    %s208 = sphi 0, %s210
    %s211 = sphi 0, %s208
    %s212 = sphi 0, %s211
    %s228 = sphi 0, %s212
  $region4: #{tpu_custom_call.1} parent=0 // loop_header_branch
    %16 = sbr.rel (%p14) target = $region8
  $region5: #{tpu_custom_call.1} parent=0 // loop_body
    %s18 = ssub.s32 %s13, 1
    %s19 = ssub.s32 %s13, 2
    %s29 = sadd.s32 1, %s22
    %p30 = scmp.ge.s32.totalorder %s29, 2
    %s31 = scalar_select %p30, 0, %s29
    %s32 = sadd.s32 1, %s21
    %s33 = scalar_select %p30, %s32, %s21
    %p34 = scmp.ge.s32.totalorder %s33, 2
    %s35 = scalar_select %p34, 0, %s33
    %s36 = sadd.s32 1, %s20
    %s37 = scalar_select %p34, %s36, %s20
    %p38 = scmp.ge.s32.totalorder %s37, 2
    %s39 = scalar_select %p38, 0, %s37
    %s40 = ssub.s32 %s20, %s39
    %s41 = ssub.s32 %s22, %s31
    %s42 = sor.u32 %s40, %s41
    %p43 = scmp.eq.s32.totalorder %s42, 0
    %s45 = sadd.s32 %s44, 1
    %s46 = scalar_select %p43, %s44, %s45
    %p49 = pneg %p43
    %p50 = scmp.eq.s32.totalorder %s13, 7
    %p51 = por %p49, %p50
    %p52 = scmp.ne.s32.totalorder %s44, %s47
    %p53 = scmp.eq.s32.totalorder %s13, 0
    %p54 = por %p52, %p53
    %p55 = scmp.ne.s32.totalorder %s44, %s47
    %p56 = scmp.eq.s32.totalorder %s18, 7
    %p57 = por %p55, %p56
    %p58 = scmp.ne.s32.totalorder %s47, %s48
    %p59 = scmp.eq.s32.totalorder %s18, 0
    %p60 = por %p58, %p59
    %p61 = scmp.ne.s32.totalorder %s47, %s48
    %p62 = scmp.eq.s32.totalorder %s19, 7
    %p63 = por %p61, %p62
    %p65 = scmp.ne.s32.totalorder %s48, %s64
    %p66 = scmp.eq.s32.totalorder %s19, 0
    %p67 = por %p65, %p66
    %s69 = sadd.s32 %s68, 1
    %p72 = scmp.eq.s32.totalorder %s13, 7
    %p73 = scmp.ne.s32.totalorder %s68, %s70
    %p74 = scmp.eq.s32.totalorder %s13, 0
    %p75 = por %p73, %p74
    %p76 = scmp.ne.s32.totalorder %s68, %s70
    %p77 = scmp.eq.s32.totalorder %s18, 7
    %p78 = por %p76, %p77
    %p79 = scmp.ne.s32.totalorder %s70, %s71
    %p80 = scmp.eq.s32.totalorder %s18, 0
    %p81 = por %p79, %p80
    %p82 = scmp.ne.s32.totalorder %s70, %s71
    %p83 = scmp.eq.s32.totalorder %s19, 7
    %p84 = por %p82, %p83
    %p86 = scmp.ne.s32.totalorder %s71, %s85
    %p87 = scmp.eq.s32.totalorder %s19, 0
    %p88 = por %p86, %p87
    %s90 = sadd.s32 %s89, 1
    %p93 = scmp.eq.s32.totalorder %s13, 7
    %p94 = scmp.ne.s32.totalorder %s89, %s91
    %p95 = scmp.eq.s32.totalorder %s13, 0
    %p96 = por %p94, %p95
    %p97 = scmp.ne.s32.totalorder %s89, %s91
    %p98 = scmp.eq.s32.totalorder %s18, 7
    %p99 = por %p97, %p98
    %p100 = scmp.ne.s32.totalorder %s91, %s92
    %p101 = scmp.eq.s32.totalorder %s18, 0
    %p102 = por %p100, %p101
    %p103 = scmp.ne.s32.totalorder %s91, %s92
    %p104 = scmp.eq.s32.totalorder %s19, 7
    %p105 = por %p103, %p104
    %p107 = scmp.ne.s32.totalorder %s92, %s106
    %p108 = scmp.eq.s32.totalorder %s19, 0
    %p109 = por %p107, %p108
    %s111 = sadd.s32 %s110, 1
    %p114 = scmp.eq.s32.totalorder %s13, 7
    %p115 = scmp.ne.s32.totalorder %s110, %s112
    %p116 = scmp.eq.s32.totalorder %s13, 0
    %p117 = por %p115, %p116
    %p118 = scmp.ne.s32.totalorder %s110, %s112
    %p119 = scmp.eq.s32.totalorder %s18, 7
    %p120 = por %p118, %p119
    %p121 = scmp.ne.s32.totalorder %s112, %s113
    %p122 = scmp.eq.s32.totalorder %s18, 0
    %p123 = por %p121, %p122
    %p124 = scmp.ne.s32.totalorder %s112, %s113
    %p125 = scmp.eq.s32.totalorder %s19, 7
    %p126 = por %p124, %p125
    %p128 = scmp.ne.s32.totalorder %s113, %s127
    %p129 = scmp.eq.s32.totalorder %s19, 0
    %p130 = por %p128, %p129
    %s132 = sadd.s32 %s131, 1
    %p135 = scmp.eq.s32.totalorder %s13, 7
    %p136 = scmp.ne.s32.totalorder %s131, %s133
    %p137 = scmp.eq.s32.totalorder %s13, 0
    %p138 = por %p136, %p137
    %p139 = scmp.ne.s32.totalorder %s131, %s133
    %p140 = scmp.eq.s32.totalorder %s18, 7
    %p141 = por %p139, %p140
    %p142 = scmp.ne.s32.totalorder %s133, %s134
    %p143 = scmp.eq.s32.totalorder %s18, 0
    %p144 = por %p142, %p143
    %p145 = scmp.ne.s32.totalorder %s133, %s134
    %p146 = scmp.eq.s32.totalorder %s19, 7
    %p147 = por %p145, %p146
    %p149 = scmp.ne.s32.totalorder %s134, %s148
    %p150 = scmp.eq.s32.totalorder %s19, 0
    %p151 = por %p149, %p150
    %s152 = ssub.s32 %s21, %s35
    %p153 = scmp.eq.s32.totalorder %s152, 0
    %s155 = sadd.s32 %s154, 1
    %s156 = scalar_select %p153, %s154, %s155
    %p159 = pneg %p153
    %p160 = scmp.eq.s32.totalorder %s13, 7
    %p161 = por %p159, %p160
    %p162 = scmp.ne.s32.totalorder %s154, %s157
    %p163 = scmp.eq.s32.totalorder %s13, 0
    %p164 = por %p162, %p163
    %p165 = scmp.ne.s32.totalorder %s154, %s157
    %p166 = scmp.eq.s32.totalorder %s18, 7
    %p167 = por %p165, %p166
    %p168 = scmp.ne.s32.totalorder %s157, %s158
    %p169 = scmp.eq.s32.totalorder %s18, 0
    %p170 = por %p168, %p169
    %p171 = scmp.ne.s32.totalorder %s157, %s158
    %p172 = scmp.eq.s32.totalorder %s19, 7
    %p173 = por %p171, %p172
    %p175 = scmp.ne.s32.totalorder %s158, %s174
    %p176 = scmp.eq.s32.totalorder %s19, 0
    %p177 = por %p175, %p176
    %s178 = ssub.s32 %s21, %s35
    %p179 = scmp.eq.s32.totalorder %s178, 0
    %s181 = sadd.s32 %s180, 1
    %s182 = scalar_select %p179, %s180, %s181
    %p185 = pneg %p179
    %p186 = scmp.eq.s32.totalorder %s13, 7
    %p187 = por %p185, %p186
    %p188 = scmp.ne.s32.totalorder %s180, %s183
    %p189 = scmp.eq.s32.totalorder %s13, 0
    %p190 = por %p188, %p189
    %p191 = scmp.ne.s32.totalorder %s180, %s183
    %p192 = scmp.eq.s32.totalorder %s18, 7
    %p193 = por %p191, %p192
    %p194 = scmp.ne.s32.totalorder %s183, %s184
    %p195 = scmp.eq.s32.totalorder %s18, 0
    %p196 = por %p194, %p195
    %p197 = scmp.ne.s32.totalorder %s183, %s184
    %p198 = scmp.eq.s32.totalorder %s19, 7
    %p199 = por %p197, %p198
    %p201 = scmp.ne.s32.totalorder %s184, %s200
    %p202 = scmp.eq.s32.totalorder %s19, 0
    %p203 = por %p201, %p202
    %s204 = ssub.s32 %s20, %s39
    %s205 = ssub.s32 %s21, %s35
    %s206 = sor.u32 %s204, %s205
    %p207 = scmp.eq.s32.totalorder %s206, 0
    %s209 = sadd.s32 %s208, 1
    %s210 = scalar_select %p207, %s208, %s209
    %p213 = pneg %p207
    %p214 = scmp.eq.s32.totalorder %s13, 7
    %p215 = por %p213, %p214
    %p216 = scmp.ne.s32.totalorder %s208, %s211
    %p217 = scmp.eq.s32.totalorder %s13, 0
    %p218 = por %p216, %p217
    %p219 = scmp.ne.s32.totalorder %s208, %s211
    %p220 = scmp.eq.s32.totalorder %s18, 7
    %p221 = por %p219, %p220
    %p222 = scmp.ne.s32.totalorder %s211, %s212
    %p223 = scmp.eq.s32.totalorder %s18, 0
    %p224 = por %p222, %p223
    %p225 = scmp.ne.s32.totalorder %s211, %s212
    %p226 = scmp.eq.s32.totalorder %s19, 7
    %p227 = por %p225, %p226
    %p229 = scmp.ne.s32.totalorder %s212, %s228
    %p230 = scmp.eq.s32.totalorder %s19, 0
    %p231 = por %p229, %p230
    %p232 = scmp.le.s32.totalorder 1, %s13
    %p233 = scmp.lt.s32.totalorder %s13, 9
    %p234 = pnand %p232, %p233
    %p235 = pneg %p234
    // Predicated region
    $region9: #{tpu_custom_call.1} parent=5 // pred_check
      _
    $region10: #{tpu_custom_call.1} parent=5 // pred_check_branch
      %237 = sbr.rel (%p234) target = $region12
    $region11: #{tpu_custom_call.1} parent=5 // pred_region
      %s238 = ssub.s32 %s13, 1
      // Predicated region
      $region13: #{tpu_custom_call.1} parent=11 // pred_check
        %p239 = pneg %p81
      $region14: #{tpu_custom_call.1} parent=11 // pred_check_branch
        %241 = sbr.rel (%p239) target = $region16
      $region15: #{tpu_custom_call.1} parent=11 // pred_region
        _
      $region16: #{tpu_custom_call.1} parent=11 // pred_fallthru
        _
      // Predicated region
      $region17: #{tpu_custom_call.1} parent=11 // pred_check
        %p242 = pneg %p102
      $region18: #{tpu_custom_call.1} parent=11 // pred_check_branch
        %244 = sbr.rel (%p242) target = $region20
      $region19: #{tpu_custom_call.1} parent=11 // pred_region
        _
      $region20: #{tpu_custom_call.1} parent=11 // pred_fallthru
        _
      // Predicated region
      $region21: #{tpu_custom_call.1} parent=11 // pred_check
        %p245 = pneg %p123
      $region22: #{tpu_custom_call.1} parent=11 // pred_check_branch
        %247 = sbr.rel (%p245) target = $region24
      $region23: #{tpu_custom_call.1} parent=11 // pred_region
        _
      $region24: #{tpu_custom_call.1} parent=11 // pred_fallthru
        _
      // Predicated region
      $region25: #{tpu_custom_call.1} parent=11 // pred_check
        %p248 = pneg %p144
      $region26: #{tpu_custom_call.1} parent=11 // pred_check_branch
        %250 = sbr.rel (%p248) target = $region28
      $region27: #{tpu_custom_call.1} parent=11 // pred_region
        _
      $region28: #{tpu_custom_call.1} parent=11 // pred_fallthru
        _
    $region12: #{tpu_custom_call.1} parent=5 // pred_fallthru
      _
    %p251 = scmp.lt.s32.totalorder %s13, 8
    // Predicated region
    $region29: #{tpu_custom_call.1} parent=5 // pred_check
      %p252 = pneg %p251
    $region30: #{tpu_custom_call.1} parent=5 // pred_check_branch
      %254 = sbr.rel (%p252) target = $region32
    $region31: #{tpu_custom_call.1} parent=5 // pred_region
      // Predicated region
      $region33: #{tpu_custom_call.1} parent=31 // pred_check
        %p255 = pneg %p54
      $region34: #{tpu_custom_call.1} parent=31 // pred_check_branch
        %257 = sbr.rel (%p255) target = $region36
      $region35: #{tpu_custom_call.1} parent=31 // pred_region
        %s258 = smul.u32 4, %s22
        %p259 = scmp.lt.s32.totalorder %s20, 1
        %s260 = scalar_select %p259, %s20, 1
        %p261 = scmp.lt.s32.totalorder %s258, 7
        %s262 = scalar_select %p261, %s258, 7
        %s263 = smul.addr %s260, 8
        %s264 = sadd.s32 %s262, %s263
        %s265 = smul.addr %s264, 4
        %s266 = scalar_lea.vmem %s0, %s265
        %s267 = smul.u32 4, %s22
      $region36: #{tpu_custom_call.1} parent=31 // pred_fallthru
        _
      // Predicated region
      $region37: #{tpu_custom_call.1} parent=31 // pred_check
        %p268 = pneg %p164
      $region38: #{tpu_custom_call.1} parent=31 // pred_check_branch
        %270 = sbr.rel (%p268) target = $region40
      $region39: #{tpu_custom_call.1} parent=31 // pred_region
        %s271 = smul.u32 32, %s21
        %p272 = scmp.lt.s32.totalorder %s271, 63
        %s273 = scalar_select %p272, %s271, 63
        %s274 = smul.addr %s273, 2
        %s275 = smul.addr %s274, 4
        %s276 = scalar_lea.vmem %s5, %s275
        %s277 = smul.u32 32, %s21
      $region40: #{tpu_custom_call.1} parent=31 // pred_fallthru
        _
      // Predicated region
      $region41: #{tpu_custom_call.1} parent=31 // pred_check
        %p278 = pneg %p190
      $region42: #{tpu_custom_call.1} parent=31 // pred_check_branch
        %280 = sbr.rel (%p278) target = $region44
      $region43: #{tpu_custom_call.1} parent=31 // pred_region
        %s281 = smul.u32 32, %s21
        %p282 = scmp.lt.s32.totalorder %s281, 63
        %s283 = scalar_select %p282, %s281, 63
        %s284 = smul.addr %s283, 8
        %s285 = scalar_lea.vmem %s6, %s284
        %s286 = smul.u32 32, %s21
      $region44: #{tpu_custom_call.1} parent=31 // pred_fallthru
        _
    $region32: #{tpu_custom_call.1} parent=5 // pred_fallthru
      _
    %p287 = scmp.le.s32.totalorder 1, %s13
    %p288 = scmp.lt.s32.totalorder %s13, 9
    %p289 = pnand %p287, %p288
    %p290 = pneg %p289
    // Predicated region
    $region45: #{tpu_custom_call.1} parent=5 // pred_check
      _
    $region46: #{tpu_custom_call.1} parent=5 // pred_check_branch
      %292 = sbr.rel (%p289) target = $region48
    $region47: #{tpu_custom_call.1} parent=5 // pred_region
      %s293 = ssub.s32 %s13, 1
      %s294 = smul.u32 4, %s25
      %p295 = scmp.lt.s32.totalorder %s23, 1
      %s296 = scalar_select %p295, %s23, 1
      %p297 = scmp.lt.s32.totalorder %s294, 7
      %s298 = scalar_select %p297, %s294, 7
      %s299 = smul.addr %s296, 8
      %s300 = sadd.s32 %s298, %s299
      %s301 = smul.addr %s300, 4
      %s302 = scalar_lea.vmem %s0, %s301
      %p303 = pneg %p60
      %p304 = pneg %p57
      %p305 = pneg %p81
      %p306 = pneg %p78
      %p307 = pneg %p102
      %p308 = pneg %p99
      %p309 = pneg %p123
      %p310 = pneg %p120
      %p311 = pneg %p144
      %p312 = pneg %p141
      %s313 = smul.u32 32, %s24
      %p314 = scmp.lt.s32.totalorder %s313, 63
      %s315 = scalar_select %p314, %s313, 63
      %s316 = smul.addr %s315, 2
      %s317 = smul.addr %s316, 4
      %s318 = scalar_lea.vmem %s5, %s317
      %p319 = pneg %p170
      %p320 = pneg %p167
      %s321 = smul.u32 32, %s24
      %p322 = scmp.lt.s32.totalorder %s321, 63
      %s323 = scalar_select %p322, %s321, 63
      %s324 = smul.addr %s323, 8
      %s325 = scalar_lea.vmem %s6, %s324
      %p326 = pneg %p196
      %p327 = pneg %p193
      %p328 = pneg %p224
      %p329 = pneg %p221
      %s330 = smul.u32 32, %s24
      %p331 = scmp.lt.s32.totalorder %s23, 1
      %s332 = scalar_select %p331, %s23, 1
      %p333 = scmp.lt.s32.totalorder %s330, 63
      %s334 = scalar_select %p333, %s330, 63
      %s335 = smul.addr %s332, 64
      %s336 = sadd.s32 %s334, %s335
      %s337 = smul.addr %s336, 8
      %s338 = scalar_lea.vmem %s7, %s337
      %s339 = smul.u32 4, %s25
      %p340 = scmp.lt.s32.totalorder %s23, 1
      %s341 = scalar_select %p340, %s23, 1
      %p342 = scmp.lt.s32.totalorder %s339, 7
      %s343 = scalar_select %p342, %s339, 7
      %s344 = smul.addr %s341, 8
      %s345 = sadd.s32 %s343, %s344
      %s346 = smul.addr %s345, 4
      %s347 = scalar_lea.vmem %s0, %s346
      %s348 = smul.u32 4, %s25
      %s349 = smul.u32 32, %s24
      %p350 = scmp.lt.s32.totalorder %s349, 63
      %s351 = scalar_select %p350, %s349, 63
      %s352 = smul.addr %s351, 2
      %s353 = smul.addr %s352, 4
      %s354 = scalar_lea.vmem %s5, %s353
      %s355 = smul.u32 32, %s24
      %s356 = smul.u32 32, %s24
      %p357 = scmp.lt.s32.totalorder %s356, 63
      %s358 = scalar_select %p357, %s356, 63
      %s359 = smul.addr %s358, 8
      %s360 = scalar_lea.vmem %s6, %s359
      %s361 = smul.u32 32, %s24
      %s362 = smul.u32 32, %s24
      %p363 = scmp.lt.s32.totalorder %s23, 1
      %s364 = scalar_select %p363, %s23, 1
      %p365 = scmp.lt.s32.totalorder %s362, 63
      %s366 = scalar_select %p365, %s362, 63
      %s367 = smul.addr %s364, 64
      %s368 = sadd.s32 %s366, %s367
      %s369 = smul.addr %s368, 8
      %s370 = scalar_lea.vmem %s7, %s369
      %s371 = smul.u32 32, %s24
      %p373 = scmp.eq.s32.totalorder %s25, 0
      // Predicated region
      $region49: #{tpu_custom_call.1} parent=47 // pred_check
        %p374 = pneg %p373
      $region50: #{tpu_custom_call.1} parent=47 // pred_check_branch
        %376 = sbr.rel (%p374) target = $region52
      $region51: #{tpu_custom_call.1} parent=47 // pred_region
        %vm377 = vcmask 7168
        %378 = vst.msk [vmem:[#allocation2] sm:$0xff] %vm377, -inf
        %379 = vst.msk [vmem:[#allocation2 + $0x8] sm:$0xff] %vm377, -inf
        %380 = vst.msk [vmem:[#allocation2 + $0x10] sm:$0xff] %vm377, -inf
        %381 = vst.msk [vmem:[#allocation2 + $0x18] sm:$0xff] %vm377, -inf
        %382 = vst.msk [vmem:[#allocation2 + $0x20] sm:$0xff] %vm377, -inf
        %383 = vst.msk [vmem:[#allocation2 + $0x28] sm:$0xff] %vm377, -inf
        %384 = vst.msk [vmem:[#allocation2 + $0x30] sm:$0xff] %vm377, -inf
        %385 = vst.msk [vmem:[#allocation2 + $0x38] sm:$0xff] %vm377, -inf
        %386 = vst.msk [vmem:[#allocation2 + $0x40] sm:$0xff] %vm377, -inf
        %387 = vst.msk [vmem:[#allocation2 + $0x48] sm:$0xff] %vm377, -inf
        %388 = vst.msk [vmem:[#allocation2 + $0x50] sm:$0xff] %vm377, -inf
        %389 = vst.msk [vmem:[#allocation2 + $0x58] sm:$0xff] %vm377, -inf
        %390 = vst.msk [vmem:[#allocation2 + $0x60] sm:$0xff] %vm377, -inf
        %391 = vst.msk [vmem:[#allocation2 + $0x68] sm:$0xff] %vm377, -inf
        %392 = vst.msk [vmem:[#allocation2 + $0x70] sm:$0xff] %vm377, -inf
        %393 = vst.msk [vmem:[#allocation2 + $0x78] sm:$0xff] %vm377, -inf
        %394 = vst.msk [vmem:[#allocation2 + $0x80] sm:$0xff] %vm377, -inf
        %395 = vst.msk [vmem:[#allocation2 + $0x88] sm:$0xff] %vm377, -inf
        %396 = vst.msk [vmem:[#allocation2 + $0x90] sm:$0xff] %vm377, -inf
        %397 = vst.msk [vmem:[#allocation2 + $0x98] sm:$0xff] %vm377, -inf
        %398 = vst.msk [vmem:[#allocation2 + $0xa0] sm:$0xff] %vm377, -inf
        %399 = vst.msk [vmem:[#allocation2 + $0xa8] sm:$0xff] %vm377, -inf
        %400 = vst.msk [vmem:[#allocation2 + $0xb0] sm:$0xff] %vm377, -inf
        %401 = vst.msk [vmem:[#allocation2 + $0xb8] sm:$0xff] %vm377, -inf
        %402 = vst.msk [vmem:[#allocation2 + $0xc0] sm:$0xff] %vm377, -inf
        %403 = vst.msk [vmem:[#allocation2 + $0xc8] sm:$0xff] %vm377, -inf
        %404 = vst.msk [vmem:[#allocation2 + $0xd0] sm:$0xff] %vm377, -inf
        %405 = vst.msk [vmem:[#allocation2 + $0xd8] sm:$0xff] %vm377, -inf
        %406 = vst.msk [vmem:[#allocation2 + $0xe0] sm:$0xff] %vm377, -inf
        %407 = vst.msk [vmem:[#allocation2 + $0xe8] sm:$0xff] %vm377, -inf
        %408 = vst.msk [vmem:[#allocation2 + $0xf0] sm:$0xff] %vm377, -inf
        %409 = vst.msk [vmem:[#allocation2 + $0xf8] sm:$0xff] %vm377, -inf
      $region52: #{tpu_custom_call.1} parent=47 // pred_fallthru
        _
      %v410 = vld [vmem:[%s347] sm:$0x77]
      %v411 = vld [vmem:[%s347 + $0x8] sm:$0x77]
      %v412 = vld [vmem:[%s1] sm:$0xff]
      %v413 = vld [vmem:[%s1 + $0x8] sm:$0xff]
      %v414 = vld [vmem:[%s1 + $0x10] sm:$0xff]
      %v415 = vld [vmem:[%s1 + $0x18] sm:$0xff]
      %v416 = vld [vmem:[%s1 + $0x20] sm:$0xff]
      %v417 = vld [vmem:[%s1 + $0x28] sm:$0xff]
      %v418 = vld [vmem:[%s1 + $0x30] sm:$0xff]
      %v419 = vld [vmem:[%s1 + $0x38] sm:$0xff]
      %421 = vset.pattern.permute.xlu0 0
      %422 = vperm.xlu0 %421, %v412
      %v423 = vpop.permute.xlu0 %422
      %426 = vset.pattern.permute.xlu0 0
      %427 = vperm.xlu0 %426, %v413
      %v428 = vpop.permute.xlu0 %427
      %431 = vset.pattern.permute.xlu0 0
      %432 = vperm.xlu0 %431, %v414
      %v433 = vpop.permute.xlu0 %432
      %436 = vset.pattern.permute.xlu0 0
      %437 = vperm.xlu0 %436, %v415
      %v438 = vpop.permute.xlu0 %437
      %441 = vset.pattern.permute.xlu0 0
      %442 = vperm.xlu0 %441, %v416
      %v443 = vpop.permute.xlu0 %442
      %446 = vset.pattern.permute.xlu0 0
      %447 = vperm.xlu0 %446, %v417
      %v448 = vpop.permute.xlu0 %447
      %451 = vset.pattern.permute.xlu0 0
      %452 = vperm.xlu0 %451, %v418
      %v453 = vpop.permute.xlu0 %452
      %456 = vset.pattern.permute.xlu0 0
      %457 = vperm.xlu0 %456, %v419
      %v458 = vpop.permute.xlu0 %457
      %v462 = vlaneseq
      %v463 = vshrl.u32 %v462, 7
      %v464 = vsub.s32 0, %v463
      %v465 = vrot.slane %v410, %v464
      %v466 = vlaneseq
      %v467 = vshrl.u32 %v466, 7
      %v468 = vsub.s32 4, %v467
      %v469 = vrot.slane %v410, %v468
      %v470 = vlaneseq
      %v471 = vshrl.u32 %v470, 7
      %v472 = vsub.s32 0, %v471
      %v473 = vrot.slane %v411, %v472
      %v474 = vlaneseq
      %v475 = vshrl.u32 %v474, 7
      %v476 = vsub.s32 4, %v475
      %v477 = vrot.slane %v411, %v476
      %v482 = vlaneseq
      %v483 = vshrl.u32 %v482, 7
      %v484 = vsub.s32 0, %v483
      %v485 = vrot.slane %v465, %v484
      %v486 = vlaneseq
      %v487 = vshrl.u32 %v486, 7
      %v488 = vsub.s32 0, %v487
      %v489 = vrot.slane %v469, %v488
      %v490 = vlaneseq
      %v491 = vshrl.u32 %v490, 7
      %v492 = vsub.s32 0, %v491
      %v493 = vrot.slane %v473, %v492
      %v494 = vlaneseq
      %v495 = vshrl.u32 %v494, 7
      %v496 = vsub.s32 0, %v495
      %v497 = vrot.slane %v477, %v496
      %v498 = vmul.f32 %v423, %v485
      %v499 = vmul.f32 %v423, %v489
      %v500 = vmul.f32 %v423, %v493
      %v501 = vmul.f32 %v423, %v497
      %v502 = vmul.f32 %v428, %v485
      %v503 = vmul.f32 %v428, %v489
      %v504 = vmul.f32 %v428, %v493
      %v505 = vmul.f32 %v428, %v497
      %v506 = vmul.f32 %v433, %v485
      %v507 = vmul.f32 %v433, %v489
      %v508 = vmul.f32 %v433, %v493
      %v509 = vmul.f32 %v433, %v497
      %v510 = vmul.f32 %v438, %v485
      %v511 = vmul.f32 %v438, %v489
      %v512 = vmul.f32 %v438, %v493
      %v513 = vmul.f32 %v438, %v497
      %v514 = vmul.f32 %v443, %v485
      %v515 = vmul.f32 %v443, %v489
      %v516 = vmul.f32 %v443, %v493
      %v517 = vmul.f32 %v443, %v497
      %v518 = vmul.f32 %v448, %v485
      %v519 = vmul.f32 %v448, %v489
      %v520 = vmul.f32 %v448, %v493
      %v521 = vmul.f32 %v448, %v497
      %v522 = vmul.f32 %v453, %v485
      %v523 = vmul.f32 %v453, %v489
      %v524 = vmul.f32 %v453, %v493
      %v525 = vmul.f32 %v453, %v497
      %v526 = vmul.f32 %v458, %v485
      %v527 = vmul.f32 %v458, %v489
      %v528 = vmul.f32 %v458, %v493
      %v529 = vmul.f32 %v458, %v497
      %530 = vset.pattern.permute.xlu0 1
      %531 = vperm.xlu0 %530, %v412
      %v532 = vpop.permute.xlu0 %531
      %534 = vset.pattern.permute.xlu0 1
      %535 = vperm.xlu0 %534, %v413
      %v536 = vpop.permute.xlu0 %535
      %538 = vset.pattern.permute.xlu0 1
      %539 = vperm.xlu0 %538, %v414
      %v540 = vpop.permute.xlu0 %539
      %542 = vset.pattern.permute.xlu0 1
      %543 = vperm.xlu0 %542, %v415
      %v544 = vpop.permute.xlu0 %543
      %546 = vset.pattern.permute.xlu0 1
      %547 = vperm.xlu0 %546, %v416
      %v548 = vpop.permute.xlu0 %547
      %550 = vset.pattern.permute.xlu0 1
      %551 = vperm.xlu0 %550, %v417
      %v552 = vpop.permute.xlu0 %551
      %554 = vset.pattern.permute.xlu0 1
      %555 = vperm.xlu0 %554, %v418
      %v556 = vpop.permute.xlu0 %555
      %558 = vset.pattern.permute.xlu0 1
      %559 = vperm.xlu0 %558, %v419
      %v560 = vpop.permute.xlu0 %559
      %v562 = vlaneseq
      %v563 = vshrl.u32 %v562, 7
      %v564 = vsub.s32 1, %v563
      %v565 = vrot.slane %v410, %v564
      %v566 = vlaneseq
      %v567 = vshrl.u32 %v566, 7
      %v568 = vsub.s32 5, %v567
      %v569 = vrot.slane %v410, %v568
      %v570 = vlaneseq
      %v571 = vshrl.u32 %v570, 7
      %v572 = vsub.s32 1, %v571
      %v573 = vrot.slane %v411, %v572
      %v574 = vlaneseq
      %v575 = vshrl.u32 %v574, 7
      %v576 = vsub.s32 5, %v575
      %v577 = vrot.slane %v411, %v576
      %v582 = vlaneseq
      %v583 = vshrl.u32 %v582, 7
      %v584 = vsub.s32 1, %v583
      %v585 = vrot.slane %v565, %v584
      %v586 = vlaneseq
      %v587 = vshrl.u32 %v586, 7
      %v588 = vsub.s32 1, %v587
      %v589 = vrot.slane %v569, %v588
      %v590 = vlaneseq
      %v591 = vshrl.u32 %v590, 7
      %v592 = vsub.s32 1, %v591
      %v593 = vrot.slane %v573, %v592
      %v594 = vlaneseq
      %v595 = vshrl.u32 %v594, 7
      %v596 = vsub.s32 1, %v595
      %v597 = vrot.slane %v577, %v596
      %v598 = vmul.f32 %v532, %v585
      %v599 = vmul.f32 %v532, %v589
      %v600 = vmul.f32 %v532, %v593
      %v601 = vmul.f32 %v532, %v597
      %v602 = vmul.f32 %v536, %v585
      %v603 = vmul.f32 %v536, %v589
      %v604 = vmul.f32 %v536, %v593
      %v605 = vmul.f32 %v536, %v597
      %v606 = vmul.f32 %v540, %v585
      %v607 = vmul.f32 %v540, %v589
      %v608 = vmul.f32 %v540, %v593
      %v609 = vmul.f32 %v540, %v597
      %v610 = vmul.f32 %v544, %v585
      %v611 = vmul.f32 %v544, %v589
      %v612 = vmul.f32 %v544, %v593
      %v613 = vmul.f32 %v544, %v597
      %v614 = vmul.f32 %v548, %v585
      %v615 = vmul.f32 %v548, %v589
      %v616 = vmul.f32 %v548, %v593
      %v617 = vmul.f32 %v548, %v597
      %v618 = vmul.f32 %v552, %v585
      %v619 = vmul.f32 %v552, %v589
      %v620 = vmul.f32 %v552, %v593
      %v621 = vmul.f32 %v552, %v597
      %v622 = vmul.f32 %v556, %v585
      %v623 = vmul.f32 %v556, %v589
      %v624 = vmul.f32 %v556, %v593
      %v625 = vmul.f32 %v556, %v597
      %v626 = vmul.f32 %v560, %v585
      %v627 = vmul.f32 %v560, %v589
      %v628 = vmul.f32 %v560, %v593
      %v629 = vmul.f32 %v560, %v597
      %v630 = vadd.f32 %v498, %v598
      %v631 = vadd.f32 %v499, %v599
      %v632 = vadd.f32 %v500, %v600
      %v633 = vadd.f32 %v501, %v601
      %v634 = vadd.f32 %v502, %v602
      %v635 = vadd.f32 %v503, %v603
      %v636 = vadd.f32 %v504, %v604
      %v637 = vadd.f32 %v505, %v605
      %v638 = vadd.f32 %v506, %v606
      %v639 = vadd.f32 %v507, %v607
      %v640 = vadd.f32 %v508, %v608
      %v641 = vadd.f32 %v509, %v609
      %v642 = vadd.f32 %v510, %v610
      %v643 = vadd.f32 %v511, %v611
      %v644 = vadd.f32 %v512, %v612
      %v645 = vadd.f32 %v513, %v613
      %v646 = vadd.f32 %v514, %v614
      %v647 = vadd.f32 %v515, %v615
      %v648 = vadd.f32 %v516, %v616
      %v649 = vadd.f32 %v517, %v617
      %v650 = vadd.f32 %v518, %v618
      %v651 = vadd.f32 %v519, %v619
      %v652 = vadd.f32 %v520, %v620
      %v653 = vadd.f32 %v521, %v621
      %v654 = vadd.f32 %v522, %v622
      %v655 = vadd.f32 %v523, %v623
      %v656 = vadd.f32 %v524, %v624
      %v657 = vadd.f32 %v525, %v625
      %v658 = vadd.f32 %v526, %v626
      %v659 = vadd.f32 %v527, %v627
      %v660 = vadd.f32 %v528, %v628
      %v661 = vadd.f32 %v529, %v629
      %662 = vset.pattern.permute.xlu0 2
      %663 = vperm.xlu0 %662, %v412
      %v664 = vpop.permute.xlu0 %663
      %666 = vset.pattern.permute.xlu0 2
      %667 = vperm.xlu0 %666, %v413
      %v668 = vpop.permute.xlu0 %667
      %670 = vset.pattern.permute.xlu0 2
      %671 = vperm.xlu0 %670, %v414
      %v672 = vpop.permute.xlu0 %671
      %674 = vset.pattern.permute.xlu0 2
      %675 = vperm.xlu0 %674, %v415
      %v676 = vpop.permute.xlu0 %675
      %678 = vset.pattern.permute.xlu0 2
      %679 = vperm.xlu0 %678, %v416
      %v680 = vpop.permute.xlu0 %679
      %682 = vset.pattern.permute.xlu0 2
      %683 = vperm.xlu0 %682, %v417
      %v684 = vpop.permute.xlu0 %683
      %686 = vset.pattern.permute.xlu0 2
      %687 = vperm.xlu0 %686, %v418
      %v688 = vpop.permute.xlu0 %687
      %690 = vset.pattern.permute.xlu0 2
      %691 = vperm.xlu0 %690, %v419
      %v692 = vpop.permute.xlu0 %691
      %v694 = vlaneseq
      %v695 = vshrl.u32 %v694, 7
      %v696 = vsub.s32 2, %v695
      %v697 = vrot.slane %v410, %v696
      %v698 = vlaneseq
      %v699 = vshrl.u32 %v698, 7
      %v700 = vsub.s32 6, %v699
      %v701 = vrot.slane %v410, %v700
      %v702 = vlaneseq
      %v703 = vshrl.u32 %v702, 7
      %v704 = vsub.s32 2, %v703
      %v705 = vrot.slane %v411, %v704
      %v706 = vlaneseq
      %v707 = vshrl.u32 %v706, 7
      %v708 = vsub.s32 6, %v707
      %v709 = vrot.slane %v411, %v708
      %v714 = vlaneseq
      %v715 = vshrl.u32 %v714, 7
      %v716 = vsub.s32 2, %v715
      %v717 = vrot.slane %v697, %v716
      %v718 = vlaneseq
      %v719 = vshrl.u32 %v718, 7
      %v720 = vsub.s32 2, %v719
      %v721 = vrot.slane %v701, %v720
      %v722 = vlaneseq
      %v723 = vshrl.u32 %v722, 7
      %v724 = vsub.s32 2, %v723
      %v725 = vrot.slane %v705, %v724
      %v726 = vlaneseq
      %v727 = vshrl.u32 %v726, 7
      %v728 = vsub.s32 2, %v727
      %v729 = vrot.slane %v709, %v728
      %v730 = vmul.f32 %v664, %v717
      %v731 = vmul.f32 %v664, %v721
      %v732 = vmul.f32 %v664, %v725
      %v733 = vmul.f32 %v664, %v729
      %v734 = vmul.f32 %v668, %v717
      %v735 = vmul.f32 %v668, %v721
      %v736 = vmul.f32 %v668, %v725
      %v737 = vmul.f32 %v668, %v729
      %v738 = vmul.f32 %v672, %v717
      %v739 = vmul.f32 %v672, %v721
      %v740 = vmul.f32 %v672, %v725
      %v741 = vmul.f32 %v672, %v729
      %v742 = vmul.f32 %v676, %v717
      %v743 = vmul.f32 %v676, %v721
      %v744 = vmul.f32 %v676, %v725
      %v745 = vmul.f32 %v676, %v729
      %v746 = vmul.f32 %v680, %v717
      %v747 = vmul.f32 %v680, %v721
      %v748 = vmul.f32 %v680, %v725
      %v749 = vmul.f32 %v680, %v729
      %v750 = vmul.f32 %v684, %v717
      %v751 = vmul.f32 %v684, %v721
      %v752 = vmul.f32 %v684, %v725
      %v753 = vmul.f32 %v684, %v729
      %v754 = vmul.f32 %v688, %v717
      %v755 = vmul.f32 %v688, %v721
      %v756 = vmul.f32 %v688, %v725
      %v757 = vmul.f32 %v688, %v729
      %v758 = vmul.f32 %v692, %v717
      %v759 = vmul.f32 %v692, %v721
      %v760 = vmul.f32 %v692, %v725
      %v761 = vmul.f32 %v692, %v729
      %v762 = vadd.f32 %v630, %v730
      %v763 = vadd.f32 %v631, %v731
      %v764 = vadd.f32 %v632, %v732
      %v765 = vadd.f32 %v633, %v733
      %v766 = vadd.f32 %v634, %v734
      %v767 = vadd.f32 %v635, %v735
      %v768 = vadd.f32 %v636, %v736
      %v769 = vadd.f32 %v637, %v737
      %v770 = vadd.f32 %v638, %v738
      %v771 = vadd.f32 %v639, %v739
      %v772 = vadd.f32 %v640, %v740
      %v773 = vadd.f32 %v641, %v741
      %v774 = vadd.f32 %v642, %v742
      %v775 = vadd.f32 %v643, %v743
      %v776 = vadd.f32 %v644, %v744
      %v777 = vadd.f32 %v645, %v745
      %v778 = vadd.f32 %v646, %v746
      %v779 = vadd.f32 %v647, %v747
      %v780 = vadd.f32 %v648, %v748
      %v781 = vadd.f32 %v649, %v749
      %v782 = vadd.f32 %v650, %v750
      %v783 = vadd.f32 %v651, %v751
      %v784 = vadd.f32 %v652, %v752
      %v785 = vadd.f32 %v653, %v753
      %v786 = vadd.f32 %v654, %v754
      %v787 = vadd.f32 %v655, %v755
      %v788 = vadd.f32 %v656, %v756
      %v789 = vadd.f32 %v657, %v757
      %v790 = vadd.f32 %v658, %v758
      %v791 = vadd.f32 %v659, %v759
      %v792 = vadd.f32 %v660, %v760
      %v793 = vadd.f32 %v661, %v761
      %v794 = vld [vmem:[%s2] sm:$0xff]
      %v795 = vld [vmem:[%s2 + $0x8] sm:$0xff]
      %v796 = vld [vmem:[%s2 + $0x10] sm:$0xff]
      %v797 = vld [vmem:[%s2 + $0x18] sm:$0xff]
      %v798 = vld [vmem:[%s2 + $0x20] sm:$0xff]
      %v799 = vld [vmem:[%s2 + $0x28] sm:$0xff]
      %v800 = vld [vmem:[%s2 + $0x30] sm:$0xff]
      %v801 = vld [vmem:[%s2 + $0x38] sm:$0xff]
      %803 = vset.pattern.permute.xlu0 0
      %804 = vperm.xlu0 %803, %v794
      %v805 = vpop.permute.xlu0 %804
      %808 = vset.pattern.permute.xlu0 0
      %809 = vperm.xlu0 %808, %v795
      %v810 = vpop.permute.xlu0 %809
      %813 = vset.pattern.permute.xlu0 0
      %814 = vperm.xlu0 %813, %v796
      %v815 = vpop.permute.xlu0 %814
      %818 = vset.pattern.permute.xlu0 0
      %819 = vperm.xlu0 %818, %v797
      %v820 = vpop.permute.xlu0 %819
      %823 = vset.pattern.permute.xlu0 0
      %824 = vperm.xlu0 %823, %v798
      %v825 = vpop.permute.xlu0 %824
      %828 = vset.pattern.permute.xlu0 0
      %829 = vperm.xlu0 %828, %v799
      %v830 = vpop.permute.xlu0 %829
      %833 = vset.pattern.permute.xlu0 0
      %834 = vperm.xlu0 %833, %v800
      %v835 = vpop.permute.xlu0 %834
      %838 = vset.pattern.permute.xlu0 0
      %839 = vperm.xlu0 %838, %v801
      %v840 = vpop.permute.xlu0 %839
      %v842 = vadd.f32 %v762, %v805
      %v843 = vadd.f32 %v763, %v805
      %v844 = vadd.f32 %v764, %v805
      %v845 = vadd.f32 %v765, %v805
      %v846 = vadd.f32 %v766, %v810
      %v847 = vadd.f32 %v767, %v810
      %v848 = vadd.f32 %v768, %v810
      %v849 = vadd.f32 %v769, %v810
      %v850 = vadd.f32 %v770, %v815
      %v851 = vadd.f32 %v771, %v815
      %v852 = vadd.f32 %v772, %v815
      %v853 = vadd.f32 %v773, %v815
      %v854 = vadd.f32 %v774, %v820
      %v855 = vadd.f32 %v775, %v820
      %v856 = vadd.f32 %v776, %v820
      %v857 = vadd.f32 %v777, %v820
      %v858 = vadd.f32 %v778, %v825
      %v859 = vadd.f32 %v779, %v825
      %v860 = vadd.f32 %v780, %v825
      %v861 = vadd.f32 %v781, %v825
      %v862 = vadd.f32 %v782, %v830
      %v863 = vadd.f32 %v783, %v830
      %v864 = vadd.f32 %v784, %v830
      %v865 = vadd.f32 %v785, %v830
      %v866 = vadd.f32 %v786, %v835
      %v867 = vadd.f32 %v787, %v835
      %v868 = vadd.f32 %v788, %v835
      %v869 = vadd.f32 %v789, %v835
      %v870 = vadd.f32 %v790, %v840
      %v871 = vadd.f32 %v791, %v840
      %v872 = vadd.f32 %v792, %v840
      %v873 = vadd.f32 %v793, %v840
      %v874 = vmax.f32 %v842, 0.0
      %v875 = vmax.f32 %v843, 0.0
      %v876 = vmax.f32 %v844, 0.0
      %v877 = vmax.f32 %v845, 0.0
      %v878 = vmax.f32 %v846, 0.0
      %v879 = vmax.f32 %v847, 0.0
      %v880 = vmax.f32 %v848, 0.0
      %v881 = vmax.f32 %v849, 0.0
      %v882 = vmax.f32 %v850, 0.0
      %v883 = vmax.f32 %v851, 0.0
      %v884 = vmax.f32 %v852, 0.0
      %v885 = vmax.f32 %v853, 0.0
      %v886 = vmax.f32 %v854, 0.0
      %v887 = vmax.f32 %v855, 0.0
      %v888 = vmax.f32 %v856, 0.0
      %v889 = vmax.f32 %v857, 0.0
      %v890 = vmax.f32 %v858, 0.0
      %v891 = vmax.f32 %v859, 0.0
      %v892 = vmax.f32 %v860, 0.0
      %v893 = vmax.f32 %v861, 0.0
      %v894 = vmax.f32 %v862, 0.0
      %v895 = vmax.f32 %v863, 0.0
      %v896 = vmax.f32 %v864, 0.0
      %v897 = vmax.f32 %v865, 0.0
      %v898 = vmax.f32 %v866, 0.0
      %v899 = vmax.f32 %v867, 0.0
      %v900 = vmax.f32 %v868, 0.0
      %v901 = vmax.f32 %v869, 0.0
      %v902 = vmax.f32 %v870, 0.0
      %v903 = vmax.f32 %v871, 0.0
      %v904 = vmax.f32 %v872, 0.0
      %v905 = vmax.f32 %v873, 0.0
      %v906 = vld [vmem:[%s3] sm:$0xf]
      %v907 = vld [vmem:[%s3 + $0x4] sm:$0xf]
      %v908 = vld [vmem:[%s3 + $0x8] sm:$0xf]
      %v909 = vld [vmem:[%s3 + $0xc] sm:$0xf]
      %v910 = vld [vmem:[%s3 + $0x10] sm:$0xf]
      %v911 = vld [vmem:[%s3 + $0x14] sm:$0xf]
      %v912 = vld [vmem:[%s3 + $0x18] sm:$0xf]
      %v913 = vld [vmem:[%s3 + $0x1c] sm:$0xf]
      %v914 = vld [vmem:[%s3 + $0x20] sm:$0xf]
      %v915 = vld [vmem:[%s3 + $0x24] sm:$0xf]
      %v916 = vld [vmem:[%s3 + $0x28] sm:$0xf]
      %v917 = vld [vmem:[%s3 + $0x2c] sm:$0xf]
      %v918 = vld [vmem:[%s3 + $0x30] sm:$0xf]
      %v919 = vld [vmem:[%s3 + $0x34] sm:$0xf]
      %v920 = vld [vmem:[%s3 + $0x38] sm:$0xf]
      %v921 = vld [vmem:[%s3 + $0x3c] sm:$0xf]
      %v922 = vld [vmem:[%s3 + $0x40] sm:$0xf]
      %v923 = vld [vmem:[%s3 + $0x44] sm:$0xf]
      %v924 = vld [vmem:[%s3 + $0x48] sm:$0xf]
      %v925 = vld [vmem:[%s3 + $0x4c] sm:$0xf]
      %v926 = vld [vmem:[%s3 + $0x50] sm:$0xf]
      %v927 = vld [vmem:[%s3 + $0x54] sm:$0xf]
      %v928 = vld [vmem:[%s3 + $0x58] sm:$0xf]
      %v929 = vld [vmem:[%s3 + $0x5c] sm:$0xf]
      %v930 = vld [vmem:[%s3 + $0x60] sm:$0xf]
      %v931 = vld [vmem:[%s3 + $0x64] sm:$0xf]
      %v932 = vld [vmem:[%s3 + $0x68] sm:$0xf]
      %v933 = vld [vmem:[%s3 + $0x6c] sm:$0xf]
      %v934 = vld [vmem:[%s3 + $0x70] sm:$0xf]
      %v935 = vld [vmem:[%s3 + $0x74] sm:$0xf]
      %v936 = vld [vmem:[%s3 + $0x78] sm:$0xf]
      %v937 = vld [vmem:[%s3 + $0x7c] sm:$0xf]
      %v938 = vpack.c.bf16 %v878, %v874
      %v939 = vpack.c.bf16 %v879, %v875
      %v940 = vpack.c.bf16 %v880, %v876
      %v941 = vpack.c.bf16 %v881, %v877
      %v942 = vpack.c.bf16 %v886, %v882
      %v943 = vpack.c.bf16 %v887, %v883
      %v944 = vpack.c.bf16 %v888, %v884
      %v945 = vpack.c.bf16 %v889, %v885
      %v946 = vpack.c.bf16 %v894, %v890
      %v947 = vpack.c.bf16 %v895, %v891
      %v948 = vpack.c.bf16 %v896, %v892
      %v949 = vpack.c.bf16 %v897, %v893
      %v950 = vpack.c.bf16 %v902, %v898
      %v951 = vpack.c.bf16 %v903, %v899
      %v952 = vpack.c.bf16 %v904, %v900
      %v953 = vpack.c.bf16 %v905, %v901
      %v954 = vld [vmem:[%s4] sm:$0xff]
      %v955 = vld [vmem:[%s4 + $0x8] sm:$0xff]
      %v956 = vld [vmem:[%s4 + $0x10] sm:$0xff]
      %v957 = vld [vmem:[%s4 + $0x18] sm:$0xff]
      %v958 = vld [vmem:[%s4 + $0x20] sm:$0xff]
      %v959 = vld [vmem:[%s4 + $0x28] sm:$0xff]
      %v960 = vld [vmem:[%s4 + $0x30] sm:$0xff]
      %v961 = vld [vmem:[%s4 + $0x38] sm:$0xff]
      %v962 = vld [vmem:[%s4 + $0x40] sm:$0xff]
      %v963 = vld [vmem:[%s4 + $0x48] sm:$0xff]
      %v964 = vld [vmem:[%s4 + $0x50] sm:$0xff]
      %v965 = vld [vmem:[%s4 + $0x58] sm:$0xff]
      %v966 = vld [vmem:[%s4 + $0x60] sm:$0xff]
      %v967 = vld [vmem:[%s4 + $0x68] sm:$0xff]
      %v968 = vld [vmem:[%s4 + $0x70] sm:$0xff]
      %v969 = vld [vmem:[%s4 + $0x78] sm:$0xff]
      %v970 = vld [vmem:[%s4 + $0x80] sm:$0xff]
      %v971 = vld [vmem:[%s4 + $0x88] sm:$0xff]
      %v972 = vld [vmem:[%s4 + $0x90] sm:$0xff]
      %v973 = vld [vmem:[%s4 + $0x98] sm:$0xff]
      %v974 = vld [vmem:[%s4 + $0xa0] sm:$0xff]
      %v975 = vld [vmem:[%s4 + $0xa8] sm:$0xff]
      %v976 = vld [vmem:[%s4 + $0xb0] sm:$0xff]
      %v977 = vld [vmem:[%s4 + $0xb8] sm:$0xff]
      %v978 = vld [vmem:[%s4 + $0xc0] sm:$0xff]
      %v979 = vld [vmem:[%s4 + $0xc8] sm:$0xff]
      %v980 = vld [vmem:[%s4 + $0xd0] sm:$0xff]
      %v981 = vld [vmem:[%s4 + $0xd8] sm:$0xff]
      %v982 = vld [vmem:[%s4 + $0xe0] sm:$0xff]
      %v983 = vld [vmem:[%s4 + $0xe8] sm:$0xff]
      %v984 = vld [vmem:[%s4 + $0xf0] sm:$0xff]
      %v985 = vld [vmem:[%s4 + $0xf8] sm:$0xff]
      %987 = vset.pattern.permute.xlu0 0
      %988 = vperm.xlu0 %987, %v954
      %v989 = vpop.permute.xlu0 %988
      %992 = vset.pattern.permute.xlu0 0
      %993 = vperm.xlu0 %992, %v955
      %v994 = vpop.permute.xlu0 %993
      %997 = vset.pattern.permute.xlu0 0
      %998 = vperm.xlu0 %997, %v956
      %v999 = vpop.permute.xlu0 %998
      %1002 = vset.pattern.permute.xlu0 0
      %1003 = vperm.xlu0 %1002, %v957
      %v1004 = vpop.permute.xlu0 %1003
      %1007 = vset.pattern.permute.xlu0 0
      %1008 = vperm.xlu0 %1007, %v958
      %v1009 = vpop.permute.xlu0 %1008
      %1012 = vset.pattern.permute.xlu0 0
      %1013 = vperm.xlu0 %1012, %v959
      %v1014 = vpop.permute.xlu0 %1013
      %1017 = vset.pattern.permute.xlu0 0
      %1018 = vperm.xlu0 %1017, %v960
      %v1019 = vpop.permute.xlu0 %1018
      %1022 = vset.pattern.permute.xlu0 0
      %1023 = vperm.xlu0 %1022, %v961
      %v1024 = vpop.permute.xlu0 %1023
      %1027 = vset.pattern.permute.xlu0 0
      %1028 = vperm.xlu0 %1027, %v962
      %v1029 = vpop.permute.xlu0 %1028
      %1032 = vset.pattern.permute.xlu0 0
      %1033 = vperm.xlu0 %1032, %v963
      %v1034 = vpop.permute.xlu0 %1033
      %1037 = vset.pattern.permute.xlu0 0
      %1038 = vperm.xlu0 %1037, %v964
      %v1039 = vpop.permute.xlu0 %1038
      %1042 = vset.pattern.permute.xlu0 0
      %1043 = vperm.xlu0 %1042, %v965
      %v1044 = vpop.permute.xlu0 %1043
      %1047 = vset.pattern.permute.xlu0 0
      %1048 = vperm.xlu0 %1047, %v966
      %v1049 = vpop.permute.xlu0 %1048
      %1052 = vset.pattern.permute.xlu0 0
      %1053 = vperm.xlu0 %1052, %v967
      %v1054 = vpop.permute.xlu0 %1053
      %1057 = vset.pattern.permute.xlu0 0
      %1058 = vperm.xlu0 %1057, %v968
      %v1059 = vpop.permute.xlu0 %1058
      %1062 = vset.pattern.permute.xlu0 0
      %1063 = vperm.xlu0 %1062, %v969
      %v1064 = vpop.permute.xlu0 %1063
      %1067 = vset.pattern.permute.xlu0 0
      %1068 = vperm.xlu0 %1067, %v970
      %v1069 = vpop.permute.xlu0 %1068
      %1072 = vset.pattern.permute.xlu0 0
      %1073 = vperm.xlu0 %1072, %v971
      %v1074 = vpop.permute.xlu0 %1073
      %1077 = vset.pattern.permute.xlu0 0
      %1078 = vperm.xlu0 %1077, %v972
      %v1079 = vpop.permute.xlu0 %1078
      %1082 = vset.pattern.permute.xlu0 0
      %1083 = vperm.xlu0 %1082, %v973
      %v1084 = vpop.permute.xlu0 %1083
      %1087 = vset.pattern.permute.xlu0 0
      %1088 = vperm.xlu0 %1087, %v974
      %v1089 = vpop.permute.xlu0 %1088
      %1092 = vset.pattern.permute.xlu0 0
      %1093 = vperm.xlu0 %1092, %v975
      %v1094 = vpop.permute.xlu0 %1093
      %1097 = vset.pattern.permute.xlu0 0
      %1098 = vperm.xlu0 %1097, %v976
      %v1099 = vpop.permute.xlu0 %1098
      %1102 = vset.pattern.permute.xlu0 0
      %1103 = vperm.xlu0 %1102, %v977
      %v1104 = vpop.permute.xlu0 %1103
      %1107 = vset.pattern.permute.xlu0 0
      %1108 = vperm.xlu0 %1107, %v978
      %v1109 = vpop.permute.xlu0 %1108
      %1112 = vset.pattern.permute.xlu0 0
      %1113 = vperm.xlu0 %1112, %v979
      %v1114 = vpop.permute.xlu0 %1113
      %1117 = vset.pattern.permute.xlu0 0
      %1118 = vperm.xlu0 %1117, %v980
      %v1119 = vpop.permute.xlu0 %1118
      %1122 = vset.pattern.permute.xlu0 0
      %1123 = vperm.xlu0 %1122, %v981
      %v1124 = vpop.permute.xlu0 %1123
      %1127 = vset.pattern.permute.xlu0 0
      %1128 = vperm.xlu0 %1127, %v982
      %v1129 = vpop.permute.xlu0 %1128
      %1132 = vset.pattern.permute.xlu0 0
      %1133 = vperm.xlu0 %1132, %v983
      %v1134 = vpop.permute.xlu0 %1133
      %1137 = vset.pattern.permute.xlu0 0
      %1138 = vperm.xlu0 %1137, %v984
      %v1139 = vpop.permute.xlu0 %1138
      %1142 = vset.pattern.permute.xlu0 0
      %1143 = vperm.xlu0 %1142, %v985
      %v1144 = vpop.permute.xlu0 %1143
      %v1178 = vunpack.c.l.b16 %v906
      %v1179 = vunpack.c.l.b16 %v907
      %v1180 = vunpack.c.l.b16 %v908
      %v1181 = vunpack.c.l.b16 %v909
      %v1182 = vunpack.c.l.b16 %v910
      %v1183 = vunpack.c.l.b16 %v911
      %v1184 = vunpack.c.l.b16 %v912
      %v1185 = vunpack.c.l.b16 %v913
      %v1186 = vunpack.c.l.b16 %v914
      %v1187 = vunpack.c.l.b16 %v915
      %v1188 = vunpack.c.l.b16 %v916
      %v1189 = vunpack.c.l.b16 %v917
      %v1190 = vunpack.c.l.b16 %v918
      %v1191 = vunpack.c.l.b16 %v919
      %v1192 = vunpack.c.l.b16 %v920
      %v1193 = vunpack.c.l.b16 %v921
      %v1194 = vunpack.c.l.b16 %v922
      %v1195 = vunpack.c.l.b16 %v923
      %v1196 = vunpack.c.l.b16 %v924
      %v1197 = vunpack.c.l.b16 %v925
      %v1198 = vunpack.c.l.b16 %v926
      %v1199 = vunpack.c.l.b16 %v927
      %v1200 = vunpack.c.l.b16 %v928
      %v1201 = vunpack.c.l.b16 %v929
      %v1202 = vunpack.c.l.b16 %v930
      %v1203 = vunpack.c.l.b16 %v931
      %v1204 = vunpack.c.l.b16 %v932
      %v1205 = vunpack.c.l.b16 %v933
      %v1206 = vunpack.c.l.b16 %v934
      %v1207 = vunpack.c.l.b16 %v935
      %v1208 = vunpack.c.l.b16 %v936
      %v1209 = vunpack.c.l.b16 %v937
      %v1210 = vpack.c.b16 %v1179, %v1178
      %v1211 = vpack.c.b16 %v1181, %v1180
      %v1212 = vpack.c.b16 %v1183, %v1182
      %v1213 = vpack.c.b16 %v1185, %v1184
      %v1214 = vpack.c.b16 %v1187, %v1186
      %v1215 = vpack.c.b16 %v1189, %v1188
      %v1216 = vpack.c.b16 %v1191, %v1190
      %v1217 = vpack.c.b16 %v1193, %v1192
      %v1218 = vpack.c.b16 %v1195, %v1194
      %v1219 = vpack.c.b16 %v1197, %v1196
      %v1220 = vpack.c.b16 %v1199, %v1198
      %v1221 = vpack.c.b16 %v1201, %v1200
      %v1222 = vpack.c.b16 %v1203, %v1202
      %v1223 = vpack.c.b16 %v1205, %v1204
      %v1224 = vpack.c.b16 %v1207, %v1206
      %v1225 = vpack.c.b16 %v1209, %v1208
      %vm1226 = vcmask 523264
      %v1228 = vsel %vm1226, %v1210, 0
      %v1231 = vsel %vm1226, %v1211, 0
      %v1234 = vsel %vm1226, %v1212, 0
      %v1237 = vsel %vm1226, %v1213, 0
      %v1240 = vsel %vm1226, %v1214, 0
      %v1243 = vsel %vm1226, %v1215, 0
      %v1246 = vsel %vm1226, %v1216, 0
      %v1249 = vsel %vm1226, %v1217, 0
      %v1252 = vsel %vm1226, %v1218, 0
      %v1255 = vsel %vm1226, %v1219, 0
      %v1258 = vsel %vm1226, %v1220, 0
      %v1261 = vsel %vm1226, %v1221, 0
      %v1264 = vsel %vm1226, %v1222, 0
      %v1267 = vsel %vm1226, %v1223, 0
      %v1270 = vsel %vm1226, %v1224, 0
      %v1273 = vsel %vm1226, %v1225, 0
      %1275 = vmatprep.subr.bf16.mxu0 0
      %1276 = vmatpush1.bf16.msra.mxu0 0
      %1277 = vmatprep.subr.bf16.mxu0 0
      %1278 = vmatpush1.bf16.msra.mxu0 0
      %1279 = vmatprep.subr.bf16.mxu0 0
      %1280 = vmatpush1.bf16.msra.mxu0 0
      %1281 = vmatprep.subr.bf16.mxu0 0
      %1282 = vmatpush1.bf16.msra.mxu0 0
      %1283 = vmatprep.subr.bf16.mxu0 %v951
      %1284 = vmatpush1.bf16.msra.mxu0 %v950
      %1285 = vmatprep.subr.bf16.mxu0 %v947
      %1286 = vmatpush1.bf16.msra.mxu0 %v946
      %1287 = vmatprep.subr.bf16.mxu0 %v943
      %1288 = vmatpush1.bf16.msra.mxu0 %v942
      %1289 = vmatprep.subr.bf16.mxu0 %v939
      %1290 = vmatpush1.bf16.msra.mxu0 %v938
      %1291 = vmatprep.subr.bf16.mxu0 0
      %1292 = vmatpush2.bf16.msra.mxu0 0
      %1293 = vmatprep.subr.bf16.mxu0 0
      %1294 = vmatpush2.bf16.msra.mxu0 0
      %1295 = vmatprep.subr.bf16.mxu0 0
      %1296 = vmatpush2.bf16.msra.mxu0 0
      %1297 = vmatprep.subr.bf16.mxu0 0
      %1298 = vmatpush2.bf16.msra.mxu0 0
      %1299 = vmatprep.subr.bf16.mxu0 0
      %1300 = vmatpush2.bf16.msra.mxu0 0
      %1301 = vmatprep.subr.bf16.mxu0 0
      %1302 = vmatpush2.bf16.msra.mxu0 0
      %1303 = vmatprep.subr.bf16.mxu0 0
      %1304 = vmatpush2.bf16.msra.mxu0 0
      %1305 = vmatprep.subr.bf16.mxu0 0
      %1306 = vmatpush2.bf16.msra.mxu0 0
      %1307 = vmatprep.mubr.bf16.mxu0 0
      %1308 = vmatmul.mubr.bf16.gmra.mxu0 %v1228
      %v1309 = vpop.f32.mrf.mxu0
      %v1310 = vadd.f32 %v989, %v1309
      %v1311 = vpop.f32.mrf.mxu0
      %v1312 = vadd.f32 %v989, %v1311
      %v1313 = vpop.f32.mrf.mxu0
      %v1314 = vadd.f32 %v994, %v1313
      %v1315 = vpop.f32.mrf.mxu0
      %v1316 = vadd.f32 %v994, %v1315
      %1317 = vmatprep.mubr.bf16.mxu0 0
      %1318 = vmatmul.mubr.bf16.gmra.mxu0 %v1231
      %v1319 = vpop.f32.mrf.mxu0
      %v1320 = vadd.f32 %v999, %v1319
      %v1321 = vpop.f32.mrf.mxu0
      %v1322 = vadd.f32 %v999, %v1321
      %v1323 = vpop.f32.mrf.mxu0
      %v1324 = vadd.f32 %v1004, %v1323
      %v1325 = vpop.f32.mrf.mxu0
      %v1326 = vadd.f32 %v1004, %v1325
      %1327 = vmatprep.mubr.bf16.mxu0 0
      %1328 = vmatmul.mubr.bf16.gmra.mxu0 %v1234
      %v1329 = vpop.f32.mrf.mxu0
      %v1330 = vadd.f32 %v1009, %v1329
      %v1331 = vpop.f32.mrf.mxu0
      %v1332 = vadd.f32 %v1009, %v1331
      %v1333 = vpop.f32.mrf.mxu0
      %v1334 = vadd.f32 %v1014, %v1333
      %v1335 = vpop.f32.mrf.mxu0
      %v1336 = vadd.f32 %v1014, %v1335
      %1337 = vmatprep.mubr.bf16.mxu0 0
      %1338 = vmatmul.mubr.bf16.gmra.mxu0 %v1237
      %v1339 = vpop.f32.mrf.mxu0
      %v1340 = vadd.f32 %v1019, %v1339
      %v1341 = vpop.f32.mrf.mxu0
      %v1342 = vadd.f32 %v1019, %v1341
      %v1343 = vpop.f32.mrf.mxu0
      %v1344 = vadd.f32 %v1024, %v1343
      %v1345 = vpop.f32.mrf.mxu0
      %v1346 = vadd.f32 %v1024, %v1345
      %1347 = vmatprep.mubr.bf16.mxu0 0
      %1348 = vmatmul.mubr.bf16.gmra.mxu0 %v1240
      %v1349 = vpop.f32.mrf.mxu0
      %v1350 = vadd.f32 %v1029, %v1349
      %v1351 = vpop.f32.mrf.mxu0
      %v1352 = vadd.f32 %v1029, %v1351
      %v1353 = vpop.f32.mrf.mxu0
      %v1354 = vadd.f32 %v1034, %v1353
      %v1355 = vpop.f32.mrf.mxu0
      %v1356 = vadd.f32 %v1034, %v1355
      %1357 = vmatprep.mubr.bf16.mxu0 0
      %1358 = vmatmul.mubr.bf16.gmra.mxu0 %v1243
      %v1359 = vpop.f32.mrf.mxu0
      %v1360 = vadd.f32 %v1039, %v1359
      %v1361 = vpop.f32.mrf.mxu0
      %v1362 = vadd.f32 %v1039, %v1361
      %v1363 = vpop.f32.mrf.mxu0
      %v1364 = vadd.f32 %v1044, %v1363
      %v1365 = vpop.f32.mrf.mxu0
      %v1366 = vadd.f32 %v1044, %v1365
      %1367 = vmatprep.mubr.bf16.mxu0 0
      %1368 = vmatmul.mubr.bf16.gmra.mxu0 %v1246
      %v1369 = vpop.f32.mrf.mxu0
      %v1370 = vadd.f32 %v1049, %v1369
      %v1371 = vpop.f32.mrf.mxu0
      %v1372 = vadd.f32 %v1049, %v1371
      %v1373 = vpop.f32.mrf.mxu0
      %v1374 = vadd.f32 %v1054, %v1373
      %v1375 = vpop.f32.mrf.mxu0
      %v1376 = vadd.f32 %v1054, %v1375
      %1377 = vmatprep.mubr.bf16.mxu0 0
      %1378 = vmatmul.mubr.bf16.gmra.mxu0 %v1249
      %v1379 = vpop.f32.mrf.mxu0
      %v1380 = vadd.f32 %v1059, %v1379
      %v1381 = vpop.f32.mrf.mxu0
      %v1382 = vadd.f32 %v1059, %v1381
      %v1383 = vpop.f32.mrf.mxu0
      %v1384 = vadd.f32 %v1064, %v1383
      %v1385 = vpop.f32.mrf.mxu0
      %v1386 = vadd.f32 %v1064, %v1385
      %1387 = vmatprep.mubr.bf16.mxu0 0
      %1388 = vmatmul.mubr.bf16.gmra.mxu0 %v1252
      %v1389 = vpop.f32.mrf.mxu0
      %v1390 = vadd.f32 %v1069, %v1389
      %v1391 = vpop.f32.mrf.mxu0
      %v1392 = vadd.f32 %v1069, %v1391
      %v1393 = vpop.f32.mrf.mxu0
      %v1394 = vadd.f32 %v1074, %v1393
      %v1395 = vpop.f32.mrf.mxu0
      %v1396 = vadd.f32 %v1074, %v1395
      %1397 = vmatprep.mubr.bf16.mxu0 0
      %1398 = vmatmul.mubr.bf16.gmra.mxu0 %v1255
      %v1399 = vpop.f32.mrf.mxu0
      %v1400 = vadd.f32 %v1079, %v1399
      %v1401 = vpop.f32.mrf.mxu0
      %v1402 = vadd.f32 %v1079, %v1401
      %v1403 = vpop.f32.mrf.mxu0
      %v1404 = vadd.f32 %v1084, %v1403
      %v1405 = vpop.f32.mrf.mxu0
      %v1406 = vadd.f32 %v1084, %v1405
      %1407 = vmatprep.mubr.bf16.mxu0 0
      %1408 = vmatmul.mubr.bf16.gmra.mxu0 %v1258
      %v1409 = vpop.f32.mrf.mxu0
      %v1410 = vadd.f32 %v1089, %v1409
      %v1411 = vpop.f32.mrf.mxu0
      %v1412 = vadd.f32 %v1089, %v1411
      %v1413 = vpop.f32.mrf.mxu0
      %v1414 = vadd.f32 %v1094, %v1413
      %v1415 = vpop.f32.mrf.mxu0
      %v1416 = vadd.f32 %v1094, %v1415
      %1417 = vmatprep.mubr.bf16.mxu0 0
      %1418 = vmatmul.mubr.bf16.gmra.mxu0 %v1261
      %v1419 = vpop.f32.mrf.mxu0
      %v1420 = vadd.f32 %v1099, %v1419
      %v1421 = vpop.f32.mrf.mxu0
      %v1422 = vadd.f32 %v1099, %v1421
      %v1423 = vpop.f32.mrf.mxu0
      %v1424 = vadd.f32 %v1104, %v1423
      %v1425 = vpop.f32.mrf.mxu0
      %v1426 = vadd.f32 %v1104, %v1425
      %1427 = vmatprep.mubr.bf16.mxu0 0
      %1428 = vmatmul.mubr.bf16.gmra.mxu0 %v1264
      %v1429 = vpop.f32.mrf.mxu0
      %v1430 = vadd.f32 %v1109, %v1429
      %v1431 = vpop.f32.mrf.mxu0
      %v1432 = vadd.f32 %v1109, %v1431
      %v1433 = vpop.f32.mrf.mxu0
      %v1434 = vadd.f32 %v1114, %v1433
      %v1435 = vpop.f32.mrf.mxu0
      %v1436 = vadd.f32 %v1114, %v1435
      %1437 = vmatprep.mubr.bf16.mxu0 0
      %1438 = vmatmul.mubr.bf16.gmra.mxu0 %v1267
      %v1439 = vpop.f32.mrf.mxu0
      %v1440 = vadd.f32 %v1119, %v1439
      %v1441 = vpop.f32.mrf.mxu0
      %v1442 = vadd.f32 %v1119, %v1441
      %v1443 = vpop.f32.mrf.mxu0
      %v1444 = vadd.f32 %v1124, %v1443
      %v1445 = vpop.f32.mrf.mxu0
      %v1446 = vadd.f32 %v1124, %v1445
      %1447 = vmatprep.mubr.bf16.mxu0 0
      %1448 = vmatmul.mubr.bf16.gmra.mxu0 %v1270
      %v1449 = vpop.f32.mrf.mxu0
      %v1450 = vadd.f32 %v1129, %v1449
      %v1451 = vpop.f32.mrf.mxu0
      %v1452 = vadd.f32 %v1129, %v1451
      %v1453 = vpop.f32.mrf.mxu0
      %v1454 = vadd.f32 %v1134, %v1453
      %v1455 = vpop.f32.mrf.mxu0
      %v1456 = vadd.f32 %v1134, %v1455
      %1457 = vmatprep.mubr.bf16.mxu0 0
      %1458 = vmatmul.mubr.bf16.gmra.mxu0 %v1273
      %v1459 = vpop.f32.mrf.mxu0
      %v1460 = vadd.f32 %v1139, %v1459
      %v1461 = vpop.f32.mrf.mxu0
      %v1462 = vadd.f32 %v1139, %v1461
      %v1463 = vpop.f32.mrf.mxu0
      %v1464 = vadd.f32 %v1144, %v1463
      %v1465 = vpop.f32.mrf.mxu0
      %v1466 = vadd.f32 %v1144, %v1465
      %1467 = vdwg.mxu0
      %1468 = vmatprep.subr.bf16.mxu0 0
      %1469 = vmatpush1.bf16.msra.mxu0 0
      %1470 = vmatprep.subr.bf16.mxu0 0
      %1471 = vmatpush1.bf16.msra.mxu0 0
      %1472 = vmatprep.subr.bf16.mxu0 0
      %1473 = vmatpush1.bf16.msra.mxu0 0
      %1474 = vmatprep.subr.bf16.mxu0 0
      %1475 = vmatpush1.bf16.msra.mxu0 0
      %1476 = vmatprep.subr.bf16.mxu0 %v953
      %1477 = vmatpush1.bf16.msra.mxu0 %v952
      %1478 = vmatprep.subr.bf16.mxu0 %v949
      %1479 = vmatpush1.bf16.msra.mxu0 %v948
      %1480 = vmatprep.subr.bf16.mxu0 %v945
      %1481 = vmatpush1.bf16.msra.mxu0 %v944
      %1482 = vmatprep.subr.bf16.mxu0 %v941
      %1483 = vmatpush1.bf16.msra.mxu0 %v940
      %1484 = vmatprep.subr.bf16.mxu0 0
      %1485 = vmatpush2.bf16.msra.mxu0 0
      %1486 = vmatprep.subr.bf16.mxu0 0
      %1487 = vmatpush2.bf16.msra.mxu0 0
      %1488 = vmatprep.subr.bf16.mxu0 0
      %1489 = vmatpush2.bf16.msra.mxu0 0
      %1490 = vmatprep.subr.bf16.mxu0 0
      %1491 = vmatpush2.bf16.msra.mxu0 0
      %1492 = vmatprep.subr.bf16.mxu0 0
      %1493 = vmatpush2.bf16.msra.mxu0 0
      %1494 = vmatprep.subr.bf16.mxu0 0
      %1495 = vmatpush2.bf16.msra.mxu0 0
      %1496 = vmatprep.subr.bf16.mxu0 0
      %1497 = vmatpush2.bf16.msra.mxu0 0
      %1498 = vmatprep.subr.bf16.mxu0 0
      %1499 = vmatpush2.bf16.msra.mxu0 0
      %1500 = vmatprep.mubr.bf16.mxu0 0
      %1501 = vmatmul.mubr.bf16.gmra.mxu0 %v1228
      %v1502 = vpop.f32.mrf.mxu0
      %v1503 = vadd.f32 %v989, %v1502
      %v1504 = vpop.f32.mrf.mxu0
      %v1505 = vadd.f32 %v989, %v1504
      %v1506 = vpop.f32.mrf.mxu0
      %v1507 = vadd.f32 %v994, %v1506
      %v1508 = vpop.f32.mrf.mxu0
      %v1509 = vadd.f32 %v994, %v1508
      %1510 = vmatprep.mubr.bf16.mxu0 0
      %1511 = vmatmul.mubr.bf16.gmra.mxu0 %v1231
      %v1512 = vpop.f32.mrf.mxu0
      %v1513 = vadd.f32 %v999, %v1512
      %v1514 = vpop.f32.mrf.mxu0
      %v1515 = vadd.f32 %v999, %v1514
      %v1516 = vpop.f32.mrf.mxu0
      %v1517 = vadd.f32 %v1004, %v1516
      %v1518 = vpop.f32.mrf.mxu0
      %v1519 = vadd.f32 %v1004, %v1518
      %1520 = vmatprep.mubr.bf16.mxu0 0
      %1521 = vmatmul.mubr.bf16.gmra.mxu0 %v1234
      %v1522 = vpop.f32.mrf.mxu0
      %v1523 = vadd.f32 %v1009, %v1522
      %v1524 = vpop.f32.mrf.mxu0
      %v1525 = vadd.f32 %v1009, %v1524
      %v1526 = vpop.f32.mrf.mxu0
      %v1527 = vadd.f32 %v1014, %v1526
      %v1528 = vpop.f32.mrf.mxu0
      %v1529 = vadd.f32 %v1014, %v1528
      %1530 = vmatprep.mubr.bf16.mxu0 0
      %1531 = vmatmul.mubr.bf16.gmra.mxu0 %v1237
      %v1532 = vpop.f32.mrf.mxu0
      %v1533 = vadd.f32 %v1019, %v1532
      %v1534 = vpop.f32.mrf.mxu0
      %v1535 = vadd.f32 %v1019, %v1534
      %v1536 = vpop.f32.mrf.mxu0
      %v1537 = vadd.f32 %v1024, %v1536
      %v1538 = vpop.f32.mrf.mxu0
      %v1539 = vadd.f32 %v1024, %v1538
      %1540 = vmatprep.mubr.bf16.mxu0 0
      %1541 = vmatmul.mubr.bf16.gmra.mxu0 %v1240
      %v1542 = vpop.f32.mrf.mxu0
      %v1543 = vadd.f32 %v1029, %v1542
      %v1544 = vpop.f32.mrf.mxu0
      %v1545 = vadd.f32 %v1029, %v1544
      %v1546 = vpop.f32.mrf.mxu0
      %v1547 = vadd.f32 %v1034, %v1546
      %v1548 = vpop.f32.mrf.mxu0
      %v1549 = vadd.f32 %v1034, %v1548
      %1550 = vmatprep.mubr.bf16.mxu0 0
      %1551 = vmatmul.mubr.bf16.gmra.mxu0 %v1243
      %v1552 = vpop.f32.mrf.mxu0
      %v1553 = vadd.f32 %v1039, %v1552
      %v1554 = vpop.f32.mrf.mxu0
      %v1555 = vadd.f32 %v1039, %v1554
      %v1556 = vpop.f32.mrf.mxu0
      %v1557 = vadd.f32 %v1044, %v1556
      %v1558 = vpop.f32.mrf.mxu0
      %v1559 = vadd.f32 %v1044, %v1558
      %1560 = vmatprep.mubr.bf16.mxu0 0
      %1561 = vmatmul.mubr.bf16.gmra.mxu0 %v1246
      %v1562 = vpop.f32.mrf.mxu0
      %v1563 = vadd.f32 %v1049, %v1562
      %v1564 = vpop.f32.mrf.mxu0
      %v1565 = vadd.f32 %v1049, %v1564
      %v1566 = vpop.f32.mrf.mxu0
      %v1567 = vadd.f32 %v1054, %v1566
      %v1568 = vpop.f32.mrf.mxu0
      %v1569 = vadd.f32 %v1054, %v1568
      %1570 = vmatprep.mubr.bf16.mxu0 0
      %1571 = vmatmul.mubr.bf16.gmra.mxu0 %v1249
      %v1572 = vpop.f32.mrf.mxu0
      %v1573 = vadd.f32 %v1059, %v1572
      %v1574 = vpop.f32.mrf.mxu0
      %v1575 = vadd.f32 %v1059, %v1574
      %v1576 = vpop.f32.mrf.mxu0
      %v1577 = vadd.f32 %v1064, %v1576
      %v1578 = vpop.f32.mrf.mxu0
      %v1579 = vadd.f32 %v1064, %v1578
      %1580 = vmatprep.mubr.bf16.mxu0 0
      %1581 = vmatmul.mubr.bf16.gmra.mxu0 %v1252
      %v1582 = vpop.f32.mrf.mxu0
      %v1583 = vadd.f32 %v1069, %v1582
      %v1584 = vpop.f32.mrf.mxu0
      %v1585 = vadd.f32 %v1069, %v1584
      %v1586 = vpop.f32.mrf.mxu0
      %v1587 = vadd.f32 %v1074, %v1586
      %v1588 = vpop.f32.mrf.mxu0
      %v1589 = vadd.f32 %v1074, %v1588
      %1590 = vmatprep.mubr.bf16.mxu0 0
      %1591 = vmatmul.mubr.bf16.gmra.mxu0 %v1255
      %v1592 = vpop.f32.mrf.mxu0
      %v1593 = vadd.f32 %v1079, %v1592
      %v1594 = vpop.f32.mrf.mxu0
      %v1595 = vadd.f32 %v1079, %v1594
      %v1596 = vpop.f32.mrf.mxu0
      %v1597 = vadd.f32 %v1084, %v1596
      %v1598 = vpop.f32.mrf.mxu0
      %v1599 = vadd.f32 %v1084, %v1598
      %1600 = vmatprep.mubr.bf16.mxu0 0
      %1601 = vmatmul.mubr.bf16.gmra.mxu0 %v1258
      %v1602 = vpop.f32.mrf.mxu0
      %v1603 = vadd.f32 %v1089, %v1602
      %v1604 = vpop.f32.mrf.mxu0
      %v1605 = vadd.f32 %v1089, %v1604
      %v1606 = vpop.f32.mrf.mxu0
      %v1607 = vadd.f32 %v1094, %v1606
      %v1608 = vpop.f32.mrf.mxu0
      %v1609 = vadd.f32 %v1094, %v1608
      %1610 = vmatprep.mubr.bf16.mxu0 0
      %1611 = vmatmul.mubr.bf16.gmra.mxu0 %v1261
      %v1612 = vpop.f32.mrf.mxu0
      %v1613 = vadd.f32 %v1099, %v1612
      %v1614 = vpop.f32.mrf.mxu0
      %v1615 = vadd.f32 %v1099, %v1614
      %v1616 = vpop.f32.mrf.mxu0
      %v1617 = vadd.f32 %v1104, %v1616
      %v1618 = vpop.f32.mrf.mxu0
      %v1619 = vadd.f32 %v1104, %v1618
      %1620 = vmatprep.mubr.bf16.mxu0 0
      %1621 = vmatmul.mubr.bf16.gmra.mxu0 %v1264
      %v1622 = vpop.f32.mrf.mxu0
      %v1623 = vadd.f32 %v1109, %v1622
      %v1624 = vpop.f32.mrf.mxu0
      %v1625 = vadd.f32 %v1109, %v1624
      %v1626 = vpop.f32.mrf.mxu0
      %v1627 = vadd.f32 %v1114, %v1626
      %v1628 = vpop.f32.mrf.mxu0
      %v1629 = vadd.f32 %v1114, %v1628
      %1630 = vmatprep.mubr.bf16.mxu0 0
      %1631 = vmatmul.mubr.bf16.gmra.mxu0 %v1267
      %v1632 = vpop.f32.mrf.mxu0
      %v1633 = vadd.f32 %v1119, %v1632
      %v1634 = vpop.f32.mrf.mxu0
      %v1635 = vadd.f32 %v1119, %v1634
      %v1636 = vpop.f32.mrf.mxu0
      %v1637 = vadd.f32 %v1124, %v1636
      %v1638 = vpop.f32.mrf.mxu0
      %v1639 = vadd.f32 %v1124, %v1638
      %1640 = vmatprep.mubr.bf16.mxu0 0
      %1641 = vmatmul.mubr.bf16.gmra.mxu0 %v1270
      %v1642 = vpop.f32.mrf.mxu0
      %v1643 = vadd.f32 %v1129, %v1642
      %v1644 = vpop.f32.mrf.mxu0
      %v1645 = vadd.f32 %v1129, %v1644
      %v1646 = vpop.f32.mrf.mxu0
      %v1647 = vadd.f32 %v1134, %v1646
      %v1648 = vpop.f32.mrf.mxu0
      %v1649 = vadd.f32 %v1134, %v1648
      %1650 = vmatprep.mubr.bf16.mxu0 0
      %1651 = vmatmul.mubr.bf16.gmra.mxu0 %v1273
      %v1652 = vpop.f32.mrf.mxu0
      %v1653 = vadd.f32 %v1139, %v1652
      %v1654 = vpop.f32.mrf.mxu0
      %v1655 = vadd.f32 %v1139, %v1654
      %v1656 = vpop.f32.mrf.mxu0
      %v1657 = vadd.f32 %v1144, %v1656
      %v1658 = vpop.f32.mrf.mxu0
      %v1659 = vadd.f32 %v1144, %v1658
      %1660 = vdwg.mxu0
      %v1661 = vmax.f32 %v1310, 0.0
      %v1662 = vmax.f32 %v1312, 0.0
      %v1663 = vmax.f32 %v1503, 0.0
      %v1664 = vmax.f32 %v1505, 0.0
      %v1665 = vmax.f32 %v1314, 0.0
      %v1666 = vmax.f32 %v1316, 0.0
      %v1667 = vmax.f32 %v1507, 0.0
      %v1668 = vmax.f32 %v1509, 0.0
      %v1669 = vmax.f32 %v1320, 0.0
      %v1670 = vmax.f32 %v1322, 0.0
      %v1671 = vmax.f32 %v1513, 0.0
      %v1672 = vmax.f32 %v1515, 0.0
      %v1673 = vmax.f32 %v1324, 0.0
      %v1674 = vmax.f32 %v1326, 0.0
      %v1675 = vmax.f32 %v1517, 0.0
      %v1676 = vmax.f32 %v1519, 0.0
      %v1677 = vmax.f32 %v1330, 0.0
      %v1678 = vmax.f32 %v1332, 0.0
      %v1679 = vmax.f32 %v1523, 0.0
      %v1680 = vmax.f32 %v1525, 0.0
      %v1681 = vmax.f32 %v1334, 0.0
      %v1682 = vmax.f32 %v1336, 0.0
      %v1683 = vmax.f32 %v1527, 0.0
      %v1684 = vmax.f32 %v1529, 0.0
      %v1685 = vmax.f32 %v1340, 0.0
      %v1686 = vmax.f32 %v1342, 0.0
      %v1687 = vmax.f32 %v1533, 0.0
      %v1688 = vmax.f32 %v1535, 0.0
      %v1689 = vmax.f32 %v1344, 0.0
      %v1690 = vmax.f32 %v1346, 0.0
      %v1691 = vmax.f32 %v1537, 0.0
      %v1692 = vmax.f32 %v1539, 0.0
      %v1693 = vmax.f32 %v1350, 0.0
      %v1694 = vmax.f32 %v1352, 0.0
      %v1695 = vmax.f32 %v1543, 0.0
      %v1696 = vmax.f32 %v1545, 0.0
      %v1697 = vmax.f32 %v1354, 0.0
      %v1698 = vmax.f32 %v1356, 0.0
      %v1699 = vmax.f32 %v1547, 0.0
      %v1700 = vmax.f32 %v1549, 0.0
      %v1701 = vmax.f32 %v1360, 0.0
      %v1702 = vmax.f32 %v1362, 0.0
      %v1703 = vmax.f32 %v1553, 0.0
      %v1704 = vmax.f32 %v1555, 0.0
      %v1705 = vmax.f32 %v1364, 0.0
      %v1706 = vmax.f32 %v1366, 0.0
      %v1707 = vmax.f32 %v1557, 0.0
      %v1708 = vmax.f32 %v1559, 0.0
      %v1709 = vmax.f32 %v1370, 0.0
      %v1710 = vmax.f32 %v1372, 0.0
      %v1711 = vmax.f32 %v1563, 0.0
      %v1712 = vmax.f32 %v1565, 0.0
      %v1713 = vmax.f32 %v1374, 0.0
      %v1714 = vmax.f32 %v1376, 0.0
      %v1715 = vmax.f32 %v1567, 0.0
      %v1716 = vmax.f32 %v1569, 0.0
      %v1717 = vmax.f32 %v1380, 0.0
      %v1718 = vmax.f32 %v1382, 0.0
      %v1719 = vmax.f32 %v1573, 0.0
      %v1720 = vmax.f32 %v1575, 0.0
      %v1721 = vmax.f32 %v1384, 0.0
      %v1722 = vmax.f32 %v1386, 0.0
      %v1723 = vmax.f32 %v1577, 0.0
      %v1724 = vmax.f32 %v1579, 0.0
      %v1725 = vmax.f32 %v1390, 0.0
      %v1726 = vmax.f32 %v1392, 0.0
      %v1727 = vmax.f32 %v1583, 0.0
      %v1728 = vmax.f32 %v1585, 0.0
      %v1729 = vmax.f32 %v1394, 0.0
      %v1730 = vmax.f32 %v1396, 0.0
      %v1731 = vmax.f32 %v1587, 0.0
      %v1732 = vmax.f32 %v1589, 0.0
      %v1733 = vmax.f32 %v1400, 0.0
      %v1734 = vmax.f32 %v1402, 0.0
      %v1735 = vmax.f32 %v1593, 0.0
      %v1736 = vmax.f32 %v1595, 0.0
      %v1737 = vmax.f32 %v1404, 0.0
      %v1738 = vmax.f32 %v1406, 0.0
      %v1739 = vmax.f32 %v1597, 0.0
      %v1740 = vmax.f32 %v1599, 0.0
      %v1741 = vmax.f32 %v1410, 0.0
      %v1742 = vmax.f32 %v1412, 0.0
      %v1743 = vmax.f32 %v1603, 0.0
      %v1744 = vmax.f32 %v1605, 0.0
      %v1745 = vmax.f32 %v1414, 0.0
      %v1746 = vmax.f32 %v1416, 0.0
      %v1747 = vmax.f32 %v1607, 0.0
      %v1748 = vmax.f32 %v1609, 0.0
      %v1749 = vmax.f32 %v1420, 0.0
      %v1750 = vmax.f32 %v1422, 0.0
      %v1751 = vmax.f32 %v1613, 0.0
      %v1752 = vmax.f32 %v1615, 0.0
      %v1753 = vmax.f32 %v1424, 0.0
      %v1754 = vmax.f32 %v1426, 0.0
      %v1755 = vmax.f32 %v1617, 0.0
      %v1756 = vmax.f32 %v1619, 0.0
      %v1757 = vmax.f32 %v1430, 0.0
      %v1758 = vmax.f32 %v1432, 0.0
      %v1759 = vmax.f32 %v1623, 0.0
      %v1760 = vmax.f32 %v1625, 0.0
      %v1761 = vmax.f32 %v1434, 0.0
      %v1762 = vmax.f32 %v1436, 0.0
      %v1763 = vmax.f32 %v1627, 0.0
      %v1764 = vmax.f32 %v1629, 0.0
      %v1765 = vmax.f32 %v1440, 0.0
      %v1766 = vmax.f32 %v1442, 0.0
      %v1767 = vmax.f32 %v1633, 0.0
      %v1768 = vmax.f32 %v1635, 0.0
      %v1769 = vmax.f32 %v1444, 0.0
      %v1770 = vmax.f32 %v1446, 0.0
      %v1771 = vmax.f32 %v1637, 0.0
      %v1772 = vmax.f32 %v1639, 0.0
      %v1773 = vmax.f32 %v1450, 0.0
      %v1774 = vmax.f32 %v1452, 0.0
      %v1775 = vmax.f32 %v1643, 0.0
      %v1776 = vmax.f32 %v1645, 0.0
      %v1777 = vmax.f32 %v1454, 0.0
      %v1778 = vmax.f32 %v1456, 0.0
      %v1779 = vmax.f32 %v1647, 0.0
      %v1780 = vmax.f32 %v1649, 0.0
      %v1781 = vmax.f32 %v1460, 0.0
      %v1782 = vmax.f32 %v1462, 0.0
      %v1783 = vmax.f32 %v1653, 0.0
      %v1784 = vmax.f32 %v1655, 0.0
      %v1785 = vmax.f32 %v1464, 0.0
      %v1786 = vmax.f32 %v1466, 0.0
      %v1787 = vmax.f32 %v1657, 0.0
      %v1788 = vmax.f32 %v1659, 0.0
      %v1789 = vld [vmem:[%s354] sm:$0xff]
      %v1790 = vld [vmem:[%s354 + $0x8] sm:$0xff]
      %v1791 = vld [vmem:[%s354 + $0x10] sm:$0xff]
      %v1792 = vld [vmem:[%s354 + $0x18] sm:$0xff]
      %v1793 = vld [vmem:[%s354 + $0x20] sm:$0xff]
      %v1794 = vld [vmem:[%s354 + $0x28] sm:$0xff]
      %v1795 = vld [vmem:[%s354 + $0x30] sm:$0xff]
      %v1796 = vld [vmem:[%s354 + $0x38] sm:$0xff]
      %v1797 = vld [vmem:[%s354 + $0x40] sm:$0xff]
      %v1798 = vld [vmem:[%s354 + $0x48] sm:$0xff]
      %v1799 = vld [vmem:[%s354 + $0x50] sm:$0xff]
      %v1800 = vld [vmem:[%s354 + $0x58] sm:$0xff]
      %v1801 = vld [vmem:[%s354 + $0x60] sm:$0xff]
      %v1802 = vld [vmem:[%s354 + $0x68] sm:$0xff]
      %v1803 = vld [vmem:[%s354 + $0x70] sm:$0xff]
      %v1804 = vld [vmem:[%s354 + $0x78] sm:$0xff]
      %v1805 = vld [vmem:[%s354 + $0x80] sm:$0xff]
      %v1806 = vld [vmem:[%s354 + $0x88] sm:$0xff]
      %v1807 = vld [vmem:[%s354 + $0x90] sm:$0xff]
      %v1808 = vld [vmem:[%s354 + $0x98] sm:$0xff]
      %v1809 = vld [vmem:[%s354 + $0xa0] sm:$0xff]
      %v1810 = vld [vmem:[%s354 + $0xa8] sm:$0xff]
      %v1811 = vld [vmem:[%s354 + $0xb0] sm:$0xff]
      %v1812 = vld [vmem:[%s354 + $0xb8] sm:$0xff]
      %v1813 = vld [vmem:[%s354 + $0xc0] sm:$0xff]
      %v1814 = vld [vmem:[%s354 + $0xc8] sm:$0xff]
      %v1815 = vld [vmem:[%s354 + $0xd0] sm:$0xff]
      %v1816 = vld [vmem:[%s354 + $0xd8] sm:$0xff]
      %v1817 = vld [vmem:[%s354 + $0xe0] sm:$0xff]
      %v1818 = vld [vmem:[%s354 + $0xe8] sm:$0xff]
      %v1819 = vld [vmem:[%s354 + $0xf0] sm:$0xff]
      %v1820 = vld [vmem:[%s354 + $0xf8] sm:$0xff]
      %v1821 = vpack.c.bf16 %v1665, %v1661
      %v1822 = vpack.c.bf16 %v1666, %v1662
      %v1823 = vpack.c.bf16 %v1667, %v1663
      %v1824 = vpack.c.bf16 %v1668, %v1664
      %v1825 = vpack.c.bf16 %v1673, %v1669
      %v1826 = vpack.c.bf16 %v1674, %v1670
      %v1827 = vpack.c.bf16 %v1675, %v1671
      %v1828 = vpack.c.bf16 %v1676, %v1672
      %v1829 = vpack.c.bf16 %v1681, %v1677
      %v1830 = vpack.c.bf16 %v1682, %v1678
      %v1831 = vpack.c.bf16 %v1683, %v1679
      %v1832 = vpack.c.bf16 %v1684, %v1680
      %v1833 = vpack.c.bf16 %v1689, %v1685
      %v1834 = vpack.c.bf16 %v1690, %v1686
      %v1835 = vpack.c.bf16 %v1691, %v1687
      %v1836 = vpack.c.bf16 %v1692, %v1688
      %v1837 = vpack.c.bf16 %v1697, %v1693
      %v1838 = vpack.c.bf16 %v1698, %v1694
      %v1839 = vpack.c.bf16 %v1699, %v1695
      %v1840 = vpack.c.bf16 %v1700, %v1696
      %v1841 = vpack.c.bf16 %v1705, %v1701
      %v1842 = vpack.c.bf16 %v1706, %v1702
      %v1843 = vpack.c.bf16 %v1707, %v1703
      %v1844 = vpack.c.bf16 %v1708, %v1704
      %v1845 = vpack.c.bf16 %v1713, %v1709
      %v1846 = vpack.c.bf16 %v1714, %v1710
      %v1847 = vpack.c.bf16 %v1715, %v1711
      %v1848 = vpack.c.bf16 %v1716, %v1712
      %v1849 = vpack.c.bf16 %v1721, %v1717
      %v1850 = vpack.c.bf16 %v1722, %v1718
      %v1851 = vpack.c.bf16 %v1723, %v1719
      %v1852 = vpack.c.bf16 %v1724, %v1720
      %v1853 = vpack.c.bf16 %v1729, %v1725
      %v1854 = vpack.c.bf16 %v1730, %v1726
      %v1855 = vpack.c.bf16 %v1731, %v1727
      %v1856 = vpack.c.bf16 %v1732, %v1728
      %v1857 = vpack.c.bf16 %v1737, %v1733
      %v1858 = vpack.c.bf16 %v1738, %v1734
      %v1859 = vpack.c.bf16 %v1739, %v1735
      %v1860 = vpack.c.bf16 %v1740, %v1736
      %v1861 = vpack.c.bf16 %v1745, %v1741
      %v1862 = vpack.c.bf16 %v1746, %v1742
      %v1863 = vpack.c.bf16 %v1747, %v1743
      %v1864 = vpack.c.bf16 %v1748, %v1744
      %v1865 = vpack.c.bf16 %v1753, %v1749
      %v1866 = vpack.c.bf16 %v1754, %v1750
      %v1867 = vpack.c.bf16 %v1755, %v1751
      %v1868 = vpack.c.bf16 %v1756, %v1752
      %v1869 = vpack.c.bf16 %v1761, %v1757
      %v1870 = vpack.c.bf16 %v1762, %v1758
      %v1871 = vpack.c.bf16 %v1763, %v1759
      %v1872 = vpack.c.bf16 %v1764, %v1760
      %v1873 = vpack.c.bf16 %v1769, %v1765
      %v1874 = vpack.c.bf16 %v1770, %v1766
      %v1875 = vpack.c.bf16 %v1771, %v1767
      %v1876 = vpack.c.bf16 %v1772, %v1768
      %v1877 = vpack.c.bf16 %v1777, %v1773
      %v1878 = vpack.c.bf16 %v1778, %v1774
      %v1879 = vpack.c.bf16 %v1779, %v1775
      %v1880 = vpack.c.bf16 %v1780, %v1776
      %v1881 = vpack.c.bf16 %v1785, %v1781
      %v1882 = vpack.c.bf16 %v1786, %v1782
      %v1883 = vpack.c.bf16 %v1787, %v1783
      %v1884 = vpack.c.bf16 %v1788, %v1784
      %v1885 = vld [vmem:[%s360] sm:$0xff]
      %v1886 = vld [vmem:[%s360 + $0x8] sm:$0xff]
      %v1887 = vld [vmem:[%s360 + $0x10] sm:$0xff]
      %v1888 = vld [vmem:[%s360 + $0x18] sm:$0xff]
      %v1889 = vld [vmem:[%s360 + $0x20] sm:$0xff]
      %v1890 = vld [vmem:[%s360 + $0x28] sm:$0xff]
      %v1891 = vld [vmem:[%s360 + $0x30] sm:$0xff]
      %v1892 = vld [vmem:[%s360 + $0x38] sm:$0xff]
      %v1893 = vld [vmem:[%s360 + $0x40] sm:$0xff]
      %v1894 = vld [vmem:[%s360 + $0x48] sm:$0xff]
      %v1895 = vld [vmem:[%s360 + $0x50] sm:$0xff]
      %v1896 = vld [vmem:[%s360 + $0x58] sm:$0xff]
      %v1897 = vld [vmem:[%s360 + $0x60] sm:$0xff]
      %v1898 = vld [vmem:[%s360 + $0x68] sm:$0xff]
      %v1899 = vld [vmem:[%s360 + $0x70] sm:$0xff]
      %v1900 = vld [vmem:[%s360 + $0x78] sm:$0xff]
      %v1901 = vld [vmem:[%s360 + $0x80] sm:$0xff]
      %v1902 = vld [vmem:[%s360 + $0x88] sm:$0xff]
      %v1903 = vld [vmem:[%s360 + $0x90] sm:$0xff]
      %v1904 = vld [vmem:[%s360 + $0x98] sm:$0xff]
      %v1905 = vld [vmem:[%s360 + $0xa0] sm:$0xff]
      %v1906 = vld [vmem:[%s360 + $0xa8] sm:$0xff]
      %v1907 = vld [vmem:[%s360 + $0xb0] sm:$0xff]
      %v1908 = vld [vmem:[%s360 + $0xb8] sm:$0xff]
      %v1909 = vld [vmem:[%s360 + $0xc0] sm:$0xff]
      %v1910 = vld [vmem:[%s360 + $0xc8] sm:$0xff]
      %v1911 = vld [vmem:[%s360 + $0xd0] sm:$0xff]
      %v1912 = vld [vmem:[%s360 + $0xd8] sm:$0xff]
      %v1913 = vld [vmem:[%s360 + $0xe0] sm:$0xff]
      %v1914 = vld [vmem:[%s360 + $0xe8] sm:$0xff]
      %v1915 = vld [vmem:[%s360 + $0xf0] sm:$0xff]
      %v1916 = vld [vmem:[%s360 + $0xf8] sm:$0xff]
      %1918 = vset.pattern.permute.xlu0 0
      %1919 = vperm.xlu0 %1918, %v1885
      %v1920 = vpop.permute.xlu0 %1919
      %1923 = vset.pattern.permute.xlu0 0
      %1924 = vperm.xlu0 %1923, %v1886
      %v1925 = vpop.permute.xlu0 %1924
      %1928 = vset.pattern.permute.xlu0 0
      %1929 = vperm.xlu0 %1928, %v1887
      %v1930 = vpop.permute.xlu0 %1929
      %1933 = vset.pattern.permute.xlu0 0
      %1934 = vperm.xlu0 %1933, %v1888
      %v1935 = vpop.permute.xlu0 %1934
      %1938 = vset.pattern.permute.xlu0 0
      %1939 = vperm.xlu0 %1938, %v1889
      %v1940 = vpop.permute.xlu0 %1939
      %1943 = vset.pattern.permute.xlu0 0
      %1944 = vperm.xlu0 %1943, %v1890
      %v1945 = vpop.permute.xlu0 %1944
      %1948 = vset.pattern.permute.xlu0 0
      %1949 = vperm.xlu0 %1948, %v1891
      %v1950 = vpop.permute.xlu0 %1949
      %1953 = vset.pattern.permute.xlu0 0
      %1954 = vperm.xlu0 %1953, %v1892
      %v1955 = vpop.permute.xlu0 %1954
      %1958 = vset.pattern.permute.xlu0 0
      %1959 = vperm.xlu0 %1958, %v1893
      %v1960 = vpop.permute.xlu0 %1959
      %1963 = vset.pattern.permute.xlu0 0
      %1964 = vperm.xlu0 %1963, %v1894
      %v1965 = vpop.permute.xlu0 %1964
      %1968 = vset.pattern.permute.xlu0 0
      %1969 = vperm.xlu0 %1968, %v1895
      %v1970 = vpop.permute.xlu0 %1969
      %1973 = vset.pattern.permute.xlu0 0
      %1974 = vperm.xlu0 %1973, %v1896
      %v1975 = vpop.permute.xlu0 %1974
      %1978 = vset.pattern.permute.xlu0 0
      %1979 = vperm.xlu0 %1978, %v1897
      %v1980 = vpop.permute.xlu0 %1979
      %1983 = vset.pattern.permute.xlu0 0
      %1984 = vperm.xlu0 %1983, %v1898
      %v1985 = vpop.permute.xlu0 %1984
      %1988 = vset.pattern.permute.xlu0 0
      %1989 = vperm.xlu0 %1988, %v1899
      %v1990 = vpop.permute.xlu0 %1989
      %1993 = vset.pattern.permute.xlu0 0
      %1994 = vperm.xlu0 %1993, %v1900
      %v1995 = vpop.permute.xlu0 %1994
      %1998 = vset.pattern.permute.xlu0 0
      %1999 = vperm.xlu0 %1998, %v1901
      %v2000 = vpop.permute.xlu0 %1999
      %2003 = vset.pattern.permute.xlu0 0
      %2004 = vperm.xlu0 %2003, %v1902
      %v2005 = vpop.permute.xlu0 %2004
      %2008 = vset.pattern.permute.xlu0 0
      %2009 = vperm.xlu0 %2008, %v1903
      %v2010 = vpop.permute.xlu0 %2009
      %2013 = vset.pattern.permute.xlu0 0
      %2014 = vperm.xlu0 %2013, %v1904
      %v2015 = vpop.permute.xlu0 %2014
      %2018 = vset.pattern.permute.xlu0 0
      %2019 = vperm.xlu0 %2018, %v1905
      %v2020 = vpop.permute.xlu0 %2019
      %2023 = vset.pattern.permute.xlu0 0
      %2024 = vperm.xlu0 %2023, %v1906
      %v2025 = vpop.permute.xlu0 %2024
      %2028 = vset.pattern.permute.xlu0 0
      %2029 = vperm.xlu0 %2028, %v1907
      %v2030 = vpop.permute.xlu0 %2029
      %2033 = vset.pattern.permute.xlu0 0
      %2034 = vperm.xlu0 %2033, %v1908
      %v2035 = vpop.permute.xlu0 %2034
      %2038 = vset.pattern.permute.xlu0 0
      %2039 = vperm.xlu0 %2038, %v1909
      %v2040 = vpop.permute.xlu0 %2039
      %2043 = vset.pattern.permute.xlu0 0
      %2044 = vperm.xlu0 %2043, %v1910
      %v2045 = vpop.permute.xlu0 %2044
      %2048 = vset.pattern.permute.xlu0 0
      %2049 = vperm.xlu0 %2048, %v1911
      %v2050 = vpop.permute.xlu0 %2049
      %2053 = vset.pattern.permute.xlu0 0
      %2054 = vperm.xlu0 %2053, %v1912
      %v2055 = vpop.permute.xlu0 %2054
      %2058 = vset.pattern.permute.xlu0 0
      %2059 = vperm.xlu0 %2058, %v1913
      %v2060 = vpop.permute.xlu0 %2059
      %2063 = vset.pattern.permute.xlu0 0
      %2064 = vperm.xlu0 %2063, %v1914
      %v2065 = vpop.permute.xlu0 %2064
      %2068 = vset.pattern.permute.xlu0 0
      %2069 = vperm.xlu0 %2068, %v1915
      %v2070 = vpop.permute.xlu0 %2069
      %2073 = vset.pattern.permute.xlu0 0
      %2074 = vperm.xlu0 %2073, %v1916
      %v2075 = vpop.permute.xlu0 %2074
      %v2109 = vunpack.c.l.b16 %v1789
      %v2110 = vunpack.c.h.b16 %v1789
      %v2111 = vunpack.c.l.b16 %v1790
      %v2112 = vunpack.c.h.b16 %v1790
      %v2113 = vunpack.c.l.b16 %v1791
      %v2114 = vunpack.c.h.b16 %v1791
      %v2115 = vunpack.c.l.b16 %v1792
      %v2116 = vunpack.c.h.b16 %v1792
      %v2117 = vunpack.c.l.b16 %v1793
      %v2118 = vunpack.c.h.b16 %v1793
      %v2119 = vunpack.c.l.b16 %v1794
      %v2120 = vunpack.c.h.b16 %v1794
      %v2121 = vunpack.c.l.b16 %v1795
      %v2122 = vunpack.c.h.b16 %v1795
      %v2123 = vunpack.c.l.b16 %v1796
      %v2124 = vunpack.c.h.b16 %v1796
      %v2125 = vunpack.c.l.b16 %v1797
      %v2126 = vunpack.c.h.b16 %v1797
      %v2127 = vunpack.c.l.b16 %v1798
      %v2128 = vunpack.c.h.b16 %v1798
      %v2129 = vunpack.c.l.b16 %v1799
      %v2130 = vunpack.c.h.b16 %v1799
      %v2131 = vunpack.c.l.b16 %v1800
      %v2132 = vunpack.c.h.b16 %v1800
      %v2133 = vunpack.c.l.b16 %v1801
      %v2134 = vunpack.c.h.b16 %v1801
      %v2135 = vunpack.c.l.b16 %v1802
      %v2136 = vunpack.c.h.b16 %v1802
      %v2137 = vunpack.c.l.b16 %v1803
      %v2138 = vunpack.c.h.b16 %v1803
      %v2139 = vunpack.c.l.b16 %v1804
      %v2140 = vunpack.c.h.b16 %v1804
      %v2141 = vunpack.c.l.b16 %v1805
      %v2142 = vunpack.c.h.b16 %v1805
      %v2143 = vunpack.c.l.b16 %v1806
      %v2144 = vunpack.c.h.b16 %v1806
      %v2145 = vunpack.c.l.b16 %v1807
      %v2146 = vunpack.c.h.b16 %v1807
      %v2147 = vunpack.c.l.b16 %v1808
      %v2148 = vunpack.c.h.b16 %v1808
      %v2149 = vunpack.c.l.b16 %v1809
      %v2150 = vunpack.c.h.b16 %v1809
      %v2151 = vunpack.c.l.b16 %v1810
      %v2152 = vunpack.c.h.b16 %v1810
      %v2153 = vunpack.c.l.b16 %v1811
      %v2154 = vunpack.c.h.b16 %v1811
      %v2155 = vunpack.c.l.b16 %v1812
      %v2156 = vunpack.c.h.b16 %v1812
      %v2157 = vunpack.c.l.b16 %v1813
      %v2158 = vunpack.c.h.b16 %v1813
      %v2159 = vunpack.c.l.b16 %v1814
      %v2160 = vunpack.c.h.b16 %v1814
      %v2161 = vunpack.c.l.b16 %v1815
      %v2162 = vunpack.c.h.b16 %v1815
      %v2163 = vunpack.c.l.b16 %v1816
      %v2164 = vunpack.c.h.b16 %v1816
      %v2165 = vunpack.c.l.b16 %v1817
      %v2166 = vunpack.c.h.b16 %v1817
      %v2167 = vunpack.c.l.b16 %v1818
      %v2168 = vunpack.c.h.b16 %v1818
      %v2169 = vunpack.c.l.b16 %v1819
      %v2170 = vunpack.c.h.b16 %v1819
      %v2171 = vunpack.c.l.b16 %v1820
      %v2172 = vunpack.c.h.b16 %v1820
      %v2173 = vpack.c.b16 %v2111, %v2109
      %v2174 = vpack.c.b16 %v2112, %v2110
      %v2175 = vpack.c.b16 %v2115, %v2113
      %v2176 = vpack.c.b16 %v2116, %v2114
      %v2177 = vpack.c.b16 %v2119, %v2117
      %v2178 = vpack.c.b16 %v2120, %v2118
      %v2179 = vpack.c.b16 %v2123, %v2121
      %v2180 = vpack.c.b16 %v2124, %v2122
      %v2181 = vpack.c.b16 %v2127, %v2125
      %v2182 = vpack.c.b16 %v2128, %v2126
      %v2183 = vpack.c.b16 %v2131, %v2129
      %v2184 = vpack.c.b16 %v2132, %v2130
      %v2185 = vpack.c.b16 %v2135, %v2133
      %v2186 = vpack.c.b16 %v2136, %v2134
      %v2187 = vpack.c.b16 %v2139, %v2137
      %v2188 = vpack.c.b16 %v2140, %v2138
      %v2189 = vpack.c.b16 %v2143, %v2141
      %v2190 = vpack.c.b16 %v2144, %v2142
      %v2191 = vpack.c.b16 %v2147, %v2145
      %v2192 = vpack.c.b16 %v2148, %v2146
      %v2193 = vpack.c.b16 %v2151, %v2149
      %v2194 = vpack.c.b16 %v2152, %v2150
      %v2195 = vpack.c.b16 %v2155, %v2153
      %v2196 = vpack.c.b16 %v2156, %v2154
      %v2197 = vpack.c.b16 %v2159, %v2157
      %v2198 = vpack.c.b16 %v2160, %v2158
      %v2199 = vpack.c.b16 %v2163, %v2161
      %v2200 = vpack.c.b16 %v2164, %v2162
      %v2201 = vpack.c.b16 %v2167, %v2165
      %v2202 = vpack.c.b16 %v2168, %v2166
      %v2203 = vpack.c.b16 %v2171, %v2169
      %v2204 = vpack.c.b16 %v2172, %v2170
      %2237 = vmatprep.subr.bf16.mxu0 %v1850
      %2238 = vmatpush1.bf16.msra.mxu0 %v1849
      %2239 = vmatprep.subr.bf16.mxu0 %v1846
      %2240 = vmatpush1.bf16.msra.mxu0 %v1845
      %2241 = vmatprep.subr.bf16.mxu0 %v1842
      %2242 = vmatpush1.bf16.msra.mxu0 %v1841
      %2243 = vmatprep.subr.bf16.mxu0 %v1838
      %2244 = vmatpush1.bf16.msra.mxu0 %v1837
      %2245 = vmatprep.subr.bf16.mxu0 %v1834
      %2246 = vmatpush1.bf16.msra.mxu0 %v1833
      %2247 = vmatprep.subr.bf16.mxu0 %v1830
      %2248 = vmatpush1.bf16.msra.mxu0 %v1829
      %2249 = vmatprep.subr.bf16.mxu0 %v1826
      %2250 = vmatpush1.bf16.msra.mxu0 %v1825
      %2251 = vmatprep.subr.bf16.mxu0 %v1822
      %2252 = vmatpush1.bf16.msra.mxu0 %v1821
      %2253 = vmatprep.subr.bf16.mxu0 %v1882
      %2254 = vmatpush2.bf16.msra.mxu0 %v1881
      %2255 = vmatprep.subr.bf16.mxu0 %v1878
      %2256 = vmatpush2.bf16.msra.mxu0 %v1877
      %2257 = vmatprep.subr.bf16.mxu0 %v1874
      %2258 = vmatpush2.bf16.msra.mxu0 %v1873
      %2259 = vmatprep.subr.bf16.mxu0 %v1870
      %2260 = vmatpush2.bf16.msra.mxu0 %v1869
      %2261 = vmatprep.subr.bf16.mxu0 %v1866
      %2262 = vmatpush2.bf16.msra.mxu0 %v1865
      %2263 = vmatprep.subr.bf16.mxu0 %v1862
      %2264 = vmatpush2.bf16.msra.mxu0 %v1861
      %2265 = vmatprep.subr.bf16.mxu0 %v1858
      %2266 = vmatpush2.bf16.msra.mxu0 %v1857
      %2267 = vmatprep.subr.bf16.mxu0 %v1854
      %2268 = vmatpush2.bf16.msra.mxu0 %v1853
      %2269 = vmatprep.mubr.bf16.mxu0 %v2174
      %2270 = vmatmul.mubr.bf16.gmra.mxu0 %v2173
      %v2271 = vpop.f32.mrf.mxu0
      %v2272 = vadd.f32 %v1920, %v2271
      %v2273 = vpop.f32.mrf.mxu0
      %v2274 = vadd.f32 %v1920, %v2273
      %v2275 = vpop.f32.mrf.mxu0
      %v2276 = vadd.f32 %v1925, %v2275
      %v2277 = vpop.f32.mrf.mxu0
      %v2278 = vadd.f32 %v1925, %v2277
      %2279 = vmatprep.mubr.bf16.mxu0 %v2176
      %2280 = vmatmul.mubr.bf16.gmra.mxu0 %v2175
      %v2281 = vpop.f32.mrf.mxu0
      %v2282 = vadd.f32 %v1930, %v2281
      %v2283 = vpop.f32.mrf.mxu0
      %v2284 = vadd.f32 %v1930, %v2283
      %v2285 = vpop.f32.mrf.mxu0
      %v2286 = vadd.f32 %v1935, %v2285
      %v2287 = vpop.f32.mrf.mxu0
      %v2288 = vadd.f32 %v1935, %v2287
      %2289 = vmatprep.mubr.bf16.mxu0 %v2178
      %2290 = vmatmul.mubr.bf16.gmra.mxu0 %v2177
      %v2291 = vpop.f32.mrf.mxu0
      %v2292 = vadd.f32 %v1940, %v2291
      %v2293 = vpop.f32.mrf.mxu0
      %v2294 = vadd.f32 %v1940, %v2293
      %v2295 = vpop.f32.mrf.mxu0
      %v2296 = vadd.f32 %v1945, %v2295
      %v2297 = vpop.f32.mrf.mxu0
      %v2298 = vadd.f32 %v1945, %v2297
      %2299 = vmatprep.mubr.bf16.mxu0 %v2180
      %2300 = vmatmul.mubr.bf16.gmra.mxu0 %v2179
      %v2301 = vpop.f32.mrf.mxu0
      %v2302 = vadd.f32 %v1950, %v2301
      %v2303 = vpop.f32.mrf.mxu0
      %v2304 = vadd.f32 %v1950, %v2303
      %v2305 = vpop.f32.mrf.mxu0
      %v2306 = vadd.f32 %v1955, %v2305
      %v2307 = vpop.f32.mrf.mxu0
      %v2308 = vadd.f32 %v1955, %v2307
      %2309 = vmatprep.mubr.bf16.mxu0 %v2182
      %2310 = vmatmul.mubr.bf16.gmra.mxu0 %v2181
      %v2311 = vpop.f32.mrf.mxu0
      %v2312 = vadd.f32 %v1960, %v2311
      %v2313 = vpop.f32.mrf.mxu0
      %v2314 = vadd.f32 %v1960, %v2313
      %v2315 = vpop.f32.mrf.mxu0
      %v2316 = vadd.f32 %v1965, %v2315
      %v2317 = vpop.f32.mrf.mxu0
      %v2318 = vadd.f32 %v1965, %v2317
      %2319 = vmatprep.mubr.bf16.mxu0 %v2184
      %2320 = vmatmul.mubr.bf16.gmra.mxu0 %v2183
      %v2321 = vpop.f32.mrf.mxu0
      %v2322 = vadd.f32 %v1970, %v2321
      %v2323 = vpop.f32.mrf.mxu0
      %v2324 = vadd.f32 %v1970, %v2323
      %v2325 = vpop.f32.mrf.mxu0
      %v2326 = vadd.f32 %v1975, %v2325
      %v2327 = vpop.f32.mrf.mxu0
      %v2328 = vadd.f32 %v1975, %v2327
      %2329 = vmatprep.mubr.bf16.mxu0 %v2186
      %2330 = vmatmul.mubr.bf16.gmra.mxu0 %v2185
      %v2331 = vpop.f32.mrf.mxu0
      %v2332 = vadd.f32 %v1980, %v2331
      %v2333 = vpop.f32.mrf.mxu0
      %v2334 = vadd.f32 %v1980, %v2333
      %v2335 = vpop.f32.mrf.mxu0
      %v2336 = vadd.f32 %v1985, %v2335
      %v2337 = vpop.f32.mrf.mxu0
      %v2338 = vadd.f32 %v1985, %v2337
      %2339 = vmatprep.mubr.bf16.mxu0 %v2188
      %2340 = vmatmul.mubr.bf16.gmra.mxu0 %v2187
      %v2341 = vpop.f32.mrf.mxu0
      %v2342 = vadd.f32 %v1990, %v2341
      %v2343 = vpop.f32.mrf.mxu0
      %v2344 = vadd.f32 %v1990, %v2343
      %v2345 = vpop.f32.mrf.mxu0
      %v2346 = vadd.f32 %v1995, %v2345
      %v2347 = vpop.f32.mrf.mxu0
      %v2348 = vadd.f32 %v1995, %v2347
      %2349 = vmatprep.mubr.bf16.mxu0 %v2190
      %2350 = vmatmul.mubr.bf16.gmra.mxu0 %v2189
      %v2351 = vpop.f32.mrf.mxu0
      %v2352 = vadd.f32 %v2000, %v2351
      %v2353 = vpop.f32.mrf.mxu0
      %v2354 = vadd.f32 %v2000, %v2353
      %v2355 = vpop.f32.mrf.mxu0
      %v2356 = vadd.f32 %v2005, %v2355
      %v2357 = vpop.f32.mrf.mxu0
      %v2358 = vadd.f32 %v2005, %v2357
      %2359 = vmatprep.mubr.bf16.mxu0 %v2192
      %2360 = vmatmul.mubr.bf16.gmra.mxu0 %v2191
      %v2361 = vpop.f32.mrf.mxu0
      %v2362 = vadd.f32 %v2010, %v2361
      %v2363 = vpop.f32.mrf.mxu0
      %v2364 = vadd.f32 %v2010, %v2363
      %v2365 = vpop.f32.mrf.mxu0
      %v2366 = vadd.f32 %v2015, %v2365
      %v2367 = vpop.f32.mrf.mxu0
      %v2368 = vadd.f32 %v2015, %v2367
      %2369 = vmatprep.mubr.bf16.mxu0 %v2194
      %2370 = vmatmul.mubr.bf16.gmra.mxu0 %v2193
      %v2371 = vpop.f32.mrf.mxu0
      %v2372 = vadd.f32 %v2020, %v2371
      %v2373 = vpop.f32.mrf.mxu0
      %v2374 = vadd.f32 %v2020, %v2373
      %v2375 = vpop.f32.mrf.mxu0
      %v2376 = vadd.f32 %v2025, %v2375
      %v2377 = vpop.f32.mrf.mxu0
      %v2378 = vadd.f32 %v2025, %v2377
      %2379 = vmatprep.mubr.bf16.mxu0 %v2196
      %2380 = vmatmul.mubr.bf16.gmra.mxu0 %v2195
      %v2381 = vpop.f32.mrf.mxu0
      %v2382 = vadd.f32 %v2030, %v2381
      %v2383 = vpop.f32.mrf.mxu0
      %v2384 = vadd.f32 %v2030, %v2383
      %v2385 = vpop.f32.mrf.mxu0
      %v2386 = vadd.f32 %v2035, %v2385
      %v2387 = vpop.f32.mrf.mxu0
      %v2388 = vadd.f32 %v2035, %v2387
      %2389 = vmatprep.mubr.bf16.mxu0 %v2198
      %2390 = vmatmul.mubr.bf16.gmra.mxu0 %v2197
      %v2391 = vpop.f32.mrf.mxu0
      %v2392 = vadd.f32 %v2040, %v2391
      %v2393 = vpop.f32.mrf.mxu0
      %v2394 = vadd.f32 %v2040, %v2393
      %v2395 = vpop.f32.mrf.mxu0
      %v2396 = vadd.f32 %v2045, %v2395
      %v2397 = vpop.f32.mrf.mxu0
      %v2398 = vadd.f32 %v2045, %v2397
      %2399 = vmatprep.mubr.bf16.mxu0 %v2200
      %2400 = vmatmul.mubr.bf16.gmra.mxu0 %v2199
      %v2401 = vpop.f32.mrf.mxu0
      %v2402 = vadd.f32 %v2050, %v2401
      %v2403 = vpop.f32.mrf.mxu0
      %v2404 = vadd.f32 %v2050, %v2403
      %v2405 = vpop.f32.mrf.mxu0
      %v2406 = vadd.f32 %v2055, %v2405
      %v2407 = vpop.f32.mrf.mxu0
      %v2408 = vadd.f32 %v2055, %v2407
      %2409 = vmatprep.mubr.bf16.mxu0 %v2202
      %2410 = vmatmul.mubr.bf16.gmra.mxu0 %v2201
      %v2411 = vpop.f32.mrf.mxu0
      %v2412 = vadd.f32 %v2060, %v2411
      %v2413 = vpop.f32.mrf.mxu0
      %v2414 = vadd.f32 %v2060, %v2413
      %v2415 = vpop.f32.mrf.mxu0
      %v2416 = vadd.f32 %v2065, %v2415
      %v2417 = vpop.f32.mrf.mxu0
      %v2418 = vadd.f32 %v2065, %v2417
      %2419 = vmatprep.mubr.bf16.mxu0 %v2204
      %2420 = vmatmul.mubr.bf16.gmra.mxu0 %v2203
      %v2421 = vpop.f32.mrf.mxu0
      %v2422 = vadd.f32 %v2070, %v2421
      %v2423 = vpop.f32.mrf.mxu0
      %v2424 = vadd.f32 %v2070, %v2423
      %v2425 = vpop.f32.mrf.mxu0
      %v2426 = vadd.f32 %v2075, %v2425
      %v2427 = vpop.f32.mrf.mxu0
      %v2428 = vadd.f32 %v2075, %v2427
      %2429 = vdwg.mxu0
      %2430 = vmatprep.subr.bf16.mxu0 %v1852
      %2431 = vmatpush1.bf16.msra.mxu0 %v1851
      %2432 = vmatprep.subr.bf16.mxu0 %v1848
      %2433 = vmatpush1.bf16.msra.mxu0 %v1847
      %2434 = vmatprep.subr.bf16.mxu0 %v1844
      %2435 = vmatpush1.bf16.msra.mxu0 %v1843
      %2436 = vmatprep.subr.bf16.mxu0 %v1840
      %2437 = vmatpush1.bf16.msra.mxu0 %v1839
      %2438 = vmatprep.subr.bf16.mxu0 %v1836
      %2439 = vmatpush1.bf16.msra.mxu0 %v1835
      %2440 = vmatprep.subr.bf16.mxu0 %v1832
      %2441 = vmatpush1.bf16.msra.mxu0 %v1831
      %2442 = vmatprep.subr.bf16.mxu0 %v1828
      %2443 = vmatpush1.bf16.msra.mxu0 %v1827
      %2444 = vmatprep.subr.bf16.mxu0 %v1824
      %2445 = vmatpush1.bf16.msra.mxu0 %v1823
      %2446 = vmatprep.subr.bf16.mxu0 %v1884
      %2447 = vmatpush2.bf16.msra.mxu0 %v1883
      %2448 = vmatprep.subr.bf16.mxu0 %v1880
      %2449 = vmatpush2.bf16.msra.mxu0 %v1879
      %2450 = vmatprep.subr.bf16.mxu0 %v1876
      %2451 = vmatpush2.bf16.msra.mxu0 %v1875
      %2452 = vmatprep.subr.bf16.mxu0 %v1872
      %2453 = vmatpush2.bf16.msra.mxu0 %v1871
      %2454 = vmatprep.subr.bf16.mxu0 %v1868
      %2455 = vmatpush2.bf16.msra.mxu0 %v1867
      %2456 = vmatprep.subr.bf16.mxu0 %v1864
      %2457 = vmatpush2.bf16.msra.mxu0 %v1863
      %2458 = vmatprep.subr.bf16.mxu0 %v1860
      %2459 = vmatpush2.bf16.msra.mxu0 %v1859
      %2460 = vmatprep.subr.bf16.mxu0 %v1856
      %2461 = vmatpush2.bf16.msra.mxu0 %v1855
      %2462 = vmatprep.mubr.bf16.mxu0 %v2174
      %2463 = vmatmul.mubr.bf16.gmra.mxu0 %v2173
      %v2464 = vpop.f32.mrf.mxu0
      %v2465 = vadd.f32 %v1920, %v2464
      %v2466 = vpop.f32.mrf.mxu0
      %v2467 = vadd.f32 %v1920, %v2466
      %v2468 = vpop.f32.mrf.mxu0
      %v2469 = vadd.f32 %v1925, %v2468
      %v2470 = vpop.f32.mrf.mxu0
      %v2471 = vadd.f32 %v1925, %v2470
      %2472 = vmatprep.mubr.bf16.mxu0 %v2176
      %2473 = vmatmul.mubr.bf16.gmra.mxu0 %v2175
      %v2474 = vpop.f32.mrf.mxu0
      %v2475 = vadd.f32 %v1930, %v2474
      %v2476 = vpop.f32.mrf.mxu0
      %v2477 = vadd.f32 %v1930, %v2476
      %v2478 = vpop.f32.mrf.mxu0
      %v2479 = vadd.f32 %v1935, %v2478
      %v2480 = vpop.f32.mrf.mxu0
      %v2481 = vadd.f32 %v1935, %v2480
      %2482 = vmatprep.mubr.bf16.mxu0 %v2178
      %2483 = vmatmul.mubr.bf16.gmra.mxu0 %v2177
      %v2484 = vpop.f32.mrf.mxu0
      %v2485 = vadd.f32 %v1940, %v2484
      %v2486 = vpop.f32.mrf.mxu0
      %v2487 = vadd.f32 %v1940, %v2486
      %v2488 = vpop.f32.mrf.mxu0
      %v2489 = vadd.f32 %v1945, %v2488
      %v2490 = vpop.f32.mrf.mxu0
      %v2491 = vadd.f32 %v1945, %v2490
      %2492 = vmatprep.mubr.bf16.mxu0 %v2180
      %2493 = vmatmul.mubr.bf16.gmra.mxu0 %v2179
      %v2494 = vpop.f32.mrf.mxu0
      %v2495 = vadd.f32 %v1950, %v2494
      %v2496 = vpop.f32.mrf.mxu0
      %v2497 = vadd.f32 %v1950, %v2496
      %v2498 = vpop.f32.mrf.mxu0
      %v2499 = vadd.f32 %v1955, %v2498
      %v2500 = vpop.f32.mrf.mxu0
      %v2501 = vadd.f32 %v1955, %v2500
      %2502 = vmatprep.mubr.bf16.mxu0 %v2182
      %2503 = vmatmul.mubr.bf16.gmra.mxu0 %v2181
      %v2504 = vpop.f32.mrf.mxu0
      %v2505 = vadd.f32 %v1960, %v2504
      %v2506 = vpop.f32.mrf.mxu0
      %v2507 = vadd.f32 %v1960, %v2506
      %v2508 = vpop.f32.mrf.mxu0
      %v2509 = vadd.f32 %v1965, %v2508
      %v2510 = vpop.f32.mrf.mxu0
      %v2511 = vadd.f32 %v1965, %v2510
      %2512 = vmatprep.mubr.bf16.mxu0 %v2184
      %2513 = vmatmul.mubr.bf16.gmra.mxu0 %v2183
      %v2514 = vpop.f32.mrf.mxu0
      %v2515 = vadd.f32 %v1970, %v2514
      %v2516 = vpop.f32.mrf.mxu0
      %v2517 = vadd.f32 %v1970, %v2516
      %v2518 = vpop.f32.mrf.mxu0
      %v2519 = vadd.f32 %v1975, %v2518
      %v2520 = vpop.f32.mrf.mxu0
      %v2521 = vadd.f32 %v1975, %v2520
      %2522 = vmatprep.mubr.bf16.mxu0 %v2186
      %2523 = vmatmul.mubr.bf16.gmra.mxu0 %v2185
      %v2524 = vpop.f32.mrf.mxu0
      %v2525 = vadd.f32 %v1980, %v2524
      %v2526 = vpop.f32.mrf.mxu0
      %v2527 = vadd.f32 %v1980, %v2526
      %v2528 = vpop.f32.mrf.mxu0
      %v2529 = vadd.f32 %v1985, %v2528
      %v2530 = vpop.f32.mrf.mxu0
      %v2531 = vadd.f32 %v1985, %v2530
      %2532 = vmatprep.mubr.bf16.mxu0 %v2188
      %2533 = vmatmul.mubr.bf16.gmra.mxu0 %v2187
      %v2534 = vpop.f32.mrf.mxu0
      %v2535 = vadd.f32 %v1990, %v2534
      %v2536 = vpop.f32.mrf.mxu0
      %v2537 = vadd.f32 %v1990, %v2536
      %v2538 = vpop.f32.mrf.mxu0
      %v2539 = vadd.f32 %v1995, %v2538
      %v2540 = vpop.f32.mrf.mxu0
      %v2541 = vadd.f32 %v1995, %v2540
      %2542 = vmatprep.mubr.bf16.mxu0 %v2190
      %2543 = vmatmul.mubr.bf16.gmra.mxu0 %v2189
      %v2544 = vpop.f32.mrf.mxu0
      %v2545 = vadd.f32 %v2000, %v2544
      %v2546 = vpop.f32.mrf.mxu0
      %v2547 = vadd.f32 %v2000, %v2546
      %v2548 = vpop.f32.mrf.mxu0
      %v2549 = vadd.f32 %v2005, %v2548
      %v2550 = vpop.f32.mrf.mxu0
      %v2551 = vadd.f32 %v2005, %v2550
      %2552 = vmatprep.mubr.bf16.mxu0 %v2192
      %2553 = vmatmul.mubr.bf16.gmra.mxu0 %v2191
      %v2554 = vpop.f32.mrf.mxu0
      %v2555 = vadd.f32 %v2010, %v2554
      %v2556 = vpop.f32.mrf.mxu0
      %v2557 = vadd.f32 %v2010, %v2556
      %v2558 = vpop.f32.mrf.mxu0
      %v2559 = vadd.f32 %v2015, %v2558
      %v2560 = vpop.f32.mrf.mxu0
      %v2561 = vadd.f32 %v2015, %v2560
      %2562 = vmatprep.mubr.bf16.mxu0 %v2194
      %2563 = vmatmul.mubr.bf16.gmra.mxu0 %v2193
      %v2564 = vpop.f32.mrf.mxu0
      %v2565 = vadd.f32 %v2020, %v2564
      %v2566 = vpop.f32.mrf.mxu0
      %v2567 = vadd.f32 %v2020, %v2566
      %v2568 = vpop.f32.mrf.mxu0
      %v2569 = vadd.f32 %v2025, %v2568
      %v2570 = vpop.f32.mrf.mxu0
      %v2571 = vadd.f32 %v2025, %v2570
      %2572 = vmatprep.mubr.bf16.mxu0 %v2196
      %2573 = vmatmul.mubr.bf16.gmra.mxu0 %v2195
      %v2574 = vpop.f32.mrf.mxu0
      %v2575 = vadd.f32 %v2030, %v2574
      %v2576 = vpop.f32.mrf.mxu0
      %v2577 = vadd.f32 %v2030, %v2576
      %v2578 = vpop.f32.mrf.mxu0
      %v2579 = vadd.f32 %v2035, %v2578
      %v2580 = vpop.f32.mrf.mxu0
      %v2581 = vadd.f32 %v2035, %v2580
      %2582 = vmatprep.mubr.bf16.mxu0 %v2198
      %2583 = vmatmul.mubr.bf16.gmra.mxu0 %v2197
      %v2584 = vpop.f32.mrf.mxu0
      %v2585 = vadd.f32 %v2040, %v2584
      %v2586 = vpop.f32.mrf.mxu0
      %v2587 = vadd.f32 %v2040, %v2586
      %v2588 = vpop.f32.mrf.mxu0
      %v2589 = vadd.f32 %v2045, %v2588
      %v2590 = vpop.f32.mrf.mxu0
      %v2591 = vadd.f32 %v2045, %v2590
      %2592 = vmatprep.mubr.bf16.mxu0 %v2200
      %2593 = vmatmul.mubr.bf16.gmra.mxu0 %v2199
      %v2594 = vpop.f32.mrf.mxu0
      %v2595 = vadd.f32 %v2050, %v2594
      %v2596 = vpop.f32.mrf.mxu0
      %v2597 = vadd.f32 %v2050, %v2596
      %v2598 = vpop.f32.mrf.mxu0
      %v2599 = vadd.f32 %v2055, %v2598
      %v2600 = vpop.f32.mrf.mxu0
      %v2601 = vadd.f32 %v2055, %v2600
      %2602 = vmatprep.mubr.bf16.mxu0 %v2202
      %2603 = vmatmul.mubr.bf16.gmra.mxu0 %v2201
      %v2604 = vpop.f32.mrf.mxu0
      %v2605 = vadd.f32 %v2060, %v2604
      %v2606 = vpop.f32.mrf.mxu0
      %v2607 = vadd.f32 %v2060, %v2606
      %v2608 = vpop.f32.mrf.mxu0
      %v2609 = vadd.f32 %v2065, %v2608
      %v2610 = vpop.f32.mrf.mxu0
      %v2611 = vadd.f32 %v2065, %v2610
      %2612 = vmatprep.mubr.bf16.mxu0 %v2204
      %2613 = vmatmul.mubr.bf16.gmra.mxu0 %v2203
      %v2614 = vpop.f32.mrf.mxu0
      %v2615 = vadd.f32 %v2070, %v2614
      %v2616 = vpop.f32.mrf.mxu0
      %v2617 = vadd.f32 %v2070, %v2616
      %v2618 = vpop.f32.mrf.mxu0
      %v2619 = vadd.f32 %v2075, %v2618
      %v2620 = vpop.f32.mrf.mxu0
      %v2621 = vadd.f32 %v2075, %v2620
      %2622 = vdwg.mxu0
      %v2623 = vld [vmem:[#allocation2] sm:$0xff]
      %v2624 = vld [vmem:[#allocation2 + $0x8] sm:$0xff]
      %v2625 = vld [vmem:[#allocation2 + $0x10] sm:$0xff]
      %v2626 = vld [vmem:[#allocation2 + $0x18] sm:$0xff]
      %v2627 = vld [vmem:[#allocation2 + $0x20] sm:$0xff]
      %v2628 = vld [vmem:[#allocation2 + $0x28] sm:$0xff]
      %v2629 = vld [vmem:[#allocation2 + $0x30] sm:$0xff]
      %v2630 = vld [vmem:[#allocation2 + $0x38] sm:$0xff]
      %v2631 = vld [vmem:[#allocation2 + $0x40] sm:$0xff]
      %v2632 = vld [vmem:[#allocation2 + $0x48] sm:$0xff]
      %v2633 = vld [vmem:[#allocation2 + $0x50] sm:$0xff]
      %v2634 = vld [vmem:[#allocation2 + $0x58] sm:$0xff]
      %v2635 = vld [vmem:[#allocation2 + $0x60] sm:$0xff]
      %v2636 = vld [vmem:[#allocation2 + $0x68] sm:$0xff]
      %v2637 = vld [vmem:[#allocation2 + $0x70] sm:$0xff]
      %v2638 = vld [vmem:[#allocation2 + $0x78] sm:$0xff]
      %v2639 = vld [vmem:[#allocation2 + $0x80] sm:$0xff]
      %v2640 = vld [vmem:[#allocation2 + $0x88] sm:$0xff]
      %v2641 = vld [vmem:[#allocation2 + $0x90] sm:$0xff]
      %v2642 = vld [vmem:[#allocation2 + $0x98] sm:$0xff]
      %v2643 = vld [vmem:[#allocation2 + $0xa0] sm:$0xff]
      %v2644 = vld [vmem:[#allocation2 + $0xa8] sm:$0xff]
      %v2645 = vld [vmem:[#allocation2 + $0xb0] sm:$0xff]
      %v2646 = vld [vmem:[#allocation2 + $0xb8] sm:$0xff]
      %v2647 = vld [vmem:[#allocation2 + $0xc0] sm:$0xff]
      %v2648 = vld [vmem:[#allocation2 + $0xc8] sm:$0xff]
      %v2649 = vld [vmem:[#allocation2 + $0xd0] sm:$0xff]
      %v2650 = vld [vmem:[#allocation2 + $0xd8] sm:$0xff]
      %v2651 = vld [vmem:[#allocation2 + $0xe0] sm:$0xff]
      %v2652 = vld [vmem:[#allocation2 + $0xe8] sm:$0xff]
      %v2653 = vld [vmem:[#allocation2 + $0xf0] sm:$0xff]
      %v2654 = vld [vmem:[#allocation2 + $0xf8] sm:$0xff]
      %v2655 = vmax.f32 %v2272, %v2274
      %v2656 = vmax.f32 %v2655, %v2465
      %v2657 = vmax.f32 %v2656, %v2467
      %2658 = vmax.xlane.f32.xlu0 %v2657
      %v2659 = vpop.xlane.xlu0 %2658
      %v2660 = vmax.f32 %v2276, %v2278
      %v2661 = vmax.f32 %v2660, %v2469
      %v2662 = vmax.f32 %v2661, %v2471
      %2663 = vmax.xlane.f32.xlu0 %v2662
      %v2664 = vpop.xlane.xlu0 %2663
      %v2665 = vmax.f32 %v2282, %v2284
      %v2666 = vmax.f32 %v2665, %v2475
      %v2667 = vmax.f32 %v2666, %v2477
      %2668 = vmax.xlane.f32.xlu0 %v2667
      %v2669 = vpop.xlane.xlu0 %2668
      %v2670 = vmax.f32 %v2286, %v2288
      %v2671 = vmax.f32 %v2670, %v2479
      %v2672 = vmax.f32 %v2671, %v2481
      %2673 = vmax.xlane.f32.xlu0 %v2672
      %v2674 = vpop.xlane.xlu0 %2673
      %v2675 = vmax.f32 %v2292, %v2294
      %v2676 = vmax.f32 %v2675, %v2485
      %v2677 = vmax.f32 %v2676, %v2487
      %2678 = vmax.xlane.f32.xlu0 %v2677
      %v2679 = vpop.xlane.xlu0 %2678
      %v2680 = vmax.f32 %v2296, %v2298
      %v2681 = vmax.f32 %v2680, %v2489
      %v2682 = vmax.f32 %v2681, %v2491
      %2683 = vmax.xlane.f32.xlu0 %v2682
      %v2684 = vpop.xlane.xlu0 %2683
      %v2685 = vmax.f32 %v2302, %v2304
      %v2686 = vmax.f32 %v2685, %v2495
      %v2687 = vmax.f32 %v2686, %v2497
      %2688 = vmax.xlane.f32.xlu0 %v2687
      %v2689 = vpop.xlane.xlu0 %2688
      %v2690 = vmax.f32 %v2306, %v2308
      %v2691 = vmax.f32 %v2690, %v2499
      %v2692 = vmax.f32 %v2691, %v2501
      %2693 = vmax.xlane.f32.xlu0 %v2692
      %v2694 = vpop.xlane.xlu0 %2693
      %v2695 = vmax.f32 %v2312, %v2314
      %v2696 = vmax.f32 %v2695, %v2505
      %v2697 = vmax.f32 %v2696, %v2507
      %2698 = vmax.xlane.f32.xlu0 %v2697
      %v2699 = vpop.xlane.xlu0 %2698
      %v2700 = vmax.f32 %v2316, %v2318
      %v2701 = vmax.f32 %v2700, %v2509
      %v2702 = vmax.f32 %v2701, %v2511
      %2703 = vmax.xlane.f32.xlu0 %v2702
      %v2704 = vpop.xlane.xlu0 %2703
      %v2705 = vmax.f32 %v2322, %v2324
      %v2706 = vmax.f32 %v2705, %v2515
      %v2707 = vmax.f32 %v2706, %v2517
      %2708 = vmax.xlane.f32.xlu0 %v2707
      %v2709 = vpop.xlane.xlu0 %2708
      %v2710 = vmax.f32 %v2326, %v2328
      %v2711 = vmax.f32 %v2710, %v2519
      %v2712 = vmax.f32 %v2711, %v2521
      %2713 = vmax.xlane.f32.xlu0 %v2712
      %v2714 = vpop.xlane.xlu0 %2713
      %v2715 = vmax.f32 %v2332, %v2334
      %v2716 = vmax.f32 %v2715, %v2525
      %v2717 = vmax.f32 %v2716, %v2527
      %2718 = vmax.xlane.f32.xlu0 %v2717
      %v2719 = vpop.xlane.xlu0 %2718
      %v2720 = vmax.f32 %v2336, %v2338
      %v2721 = vmax.f32 %v2720, %v2529
      %v2722 = vmax.f32 %v2721, %v2531
      %2723 = vmax.xlane.f32.xlu0 %v2722
      %v2724 = vpop.xlane.xlu0 %2723
      %v2725 = vmax.f32 %v2342, %v2344
      %v2726 = vmax.f32 %v2725, %v2535
      %v2727 = vmax.f32 %v2726, %v2537
      %2728 = vmax.xlane.f32.xlu0 %v2727
      %v2729 = vpop.xlane.xlu0 %2728
      %v2730 = vmax.f32 %v2346, %v2348
      %v2731 = vmax.f32 %v2730, %v2539
      %v2732 = vmax.f32 %v2731, %v2541
      %2733 = vmax.xlane.f32.xlu0 %v2732
      %v2734 = vpop.xlane.xlu0 %2733
      %v2735 = vmax.f32 %v2352, %v2354
      %v2736 = vmax.f32 %v2735, %v2545
      %v2737 = vmax.f32 %v2736, %v2547
      %2738 = vmax.xlane.f32.xlu0 %v2737
      %v2739 = vpop.xlane.xlu0 %2738
      %v2740 = vmax.f32 %v2356, %v2358
      %v2741 = vmax.f32 %v2740, %v2549
      %v2742 = vmax.f32 %v2741, %v2551
      %2743 = vmax.xlane.f32.xlu0 %v2742
      %v2744 = vpop.xlane.xlu0 %2743
      %v2745 = vmax.f32 %v2362, %v2364
      %v2746 = vmax.f32 %v2745, %v2555
      %v2747 = vmax.f32 %v2746, %v2557
      %2748 = vmax.xlane.f32.xlu0 %v2747
      %v2749 = vpop.xlane.xlu0 %2748
      %v2750 = vmax.f32 %v2366, %v2368
      %v2751 = vmax.f32 %v2750, %v2559
      %v2752 = vmax.f32 %v2751, %v2561
      %2753 = vmax.xlane.f32.xlu0 %v2752
      %v2754 = vpop.xlane.xlu0 %2753
      %v2755 = vmax.f32 %v2372, %v2374
      %v2756 = vmax.f32 %v2755, %v2565
      %v2757 = vmax.f32 %v2756, %v2567
      %2758 = vmax.xlane.f32.xlu0 %v2757
      %v2759 = vpop.xlane.xlu0 %2758
      %v2760 = vmax.f32 %v2376, %v2378
      %v2761 = vmax.f32 %v2760, %v2569
      %v2762 = vmax.f32 %v2761, %v2571
      %2763 = vmax.xlane.f32.xlu0 %v2762
      %v2764 = vpop.xlane.xlu0 %2763
      %v2765 = vmax.f32 %v2382, %v2384
      %v2766 = vmax.f32 %v2765, %v2575
      %v2767 = vmax.f32 %v2766, %v2577
      %2768 = vmax.xlane.f32.xlu0 %v2767
      %v2769 = vpop.xlane.xlu0 %2768
      %v2770 = vmax.f32 %v2386, %v2388
      %v2771 = vmax.f32 %v2770, %v2579
      %v2772 = vmax.f32 %v2771, %v2581
      %2773 = vmax.xlane.f32.xlu0 %v2772
      %v2774 = vpop.xlane.xlu0 %2773
      %v2775 = vmax.f32 %v2392, %v2394
      %v2776 = vmax.f32 %v2775, %v2585
      %v2777 = vmax.f32 %v2776, %v2587
      %2778 = vmax.xlane.f32.xlu0 %v2777
      %v2779 = vpop.xlane.xlu0 %2778
      %v2780 = vmax.f32 %v2396, %v2398
      %v2781 = vmax.f32 %v2780, %v2589
      %v2782 = vmax.f32 %v2781, %v2591
      %2783 = vmax.xlane.f32.xlu0 %v2782
      %v2784 = vpop.xlane.xlu0 %2783
      %v2785 = vmax.f32 %v2402, %v2404
      %v2786 = vmax.f32 %v2785, %v2595
      %v2787 = vmax.f32 %v2786, %v2597
      %2788 = vmax.xlane.f32.xlu0 %v2787
      %v2789 = vpop.xlane.xlu0 %2788
      %v2790 = vmax.f32 %v2406, %v2408
      %v2791 = vmax.f32 %v2790, %v2599
      %v2792 = vmax.f32 %v2791, %v2601
      %2793 = vmax.xlane.f32.xlu0 %v2792
      %v2794 = vpop.xlane.xlu0 %2793
      %v2795 = vmax.f32 %v2412, %v2414
      %v2796 = vmax.f32 %v2795, %v2605
      %v2797 = vmax.f32 %v2796, %v2607
      %2798 = vmax.xlane.f32.xlu0 %v2797
      %v2799 = vpop.xlane.xlu0 %2798
      %v2800 = vmax.f32 %v2416, %v2418
      %v2801 = vmax.f32 %v2800, %v2609
      %v2802 = vmax.f32 %v2801, %v2611
      %2803 = vmax.xlane.f32.xlu0 %v2802
      %v2804 = vpop.xlane.xlu0 %2803
      %v2805 = vmax.f32 %v2422, %v2424
      %v2806 = vmax.f32 %v2805, %v2615
      %v2807 = vmax.f32 %v2806, %v2617
      %2808 = vmax.xlane.f32.xlu0 %v2807
      %v2809 = vpop.xlane.xlu0 %2808
      %v2810 = vmax.f32 %v2426, %v2428
      %v2811 = vmax.f32 %v2810, %v2619
      %v2812 = vmax.f32 %v2811, %v2621
      %2813 = vmax.xlane.f32.xlu0 %v2812
      %v2814 = vpop.xlane.xlu0 %2813
      %v2815 = vmax.f32 %v2623, %v2659
      %v2816 = vmax.f32 %v2624, %v2664
      %v2817 = vmax.f32 %v2625, %v2669
      %v2818 = vmax.f32 %v2626, %v2674
      %v2819 = vmax.f32 %v2627, %v2679
      %v2820 = vmax.f32 %v2628, %v2684
      %v2821 = vmax.f32 %v2629, %v2689
      %v2822 = vmax.f32 %v2630, %v2694
      %v2823 = vmax.f32 %v2631, %v2699
      %v2824 = vmax.f32 %v2632, %v2704
      %v2825 = vmax.f32 %v2633, %v2709
      %v2826 = vmax.f32 %v2634, %v2714
      %v2827 = vmax.f32 %v2635, %v2719
      %v2828 = vmax.f32 %v2636, %v2724
      %v2829 = vmax.f32 %v2637, %v2729
      %v2830 = vmax.f32 %v2638, %v2734
      %v2831 = vmax.f32 %v2639, %v2739
      %v2832 = vmax.f32 %v2640, %v2744
      %v2833 = vmax.f32 %v2641, %v2749
      %v2834 = vmax.f32 %v2642, %v2754
      %v2835 = vmax.f32 %v2643, %v2759
      %v2836 = vmax.f32 %v2644, %v2764
      %v2837 = vmax.f32 %v2645, %v2769
      %v2838 = vmax.f32 %v2646, %v2774
      %v2839 = vmax.f32 %v2647, %v2779
      %v2840 = vmax.f32 %v2648, %v2784
      %v2841 = vmax.f32 %v2649, %v2789
      %v2842 = vmax.f32 %v2650, %v2794
      %v2843 = vmax.f32 %v2651, %v2799
      %v2844 = vmax.f32 %v2652, %v2804
      %v2845 = vmax.f32 %v2653, %v2809
      %v2846 = vmax.f32 %v2654, %v2814
      %vm2847 = vcmask 7168
      %2848 = vst.msk [vmem:[#allocation2] sm:$0xff] %vm2847, %v2815
      %2849 = vst.msk [vmem:[#allocation2 + $0x8] sm:$0xff] %vm2847, %v2816
      %2850 = vst.msk [vmem:[#allocation2 + $0x10] sm:$0xff] %vm2847, %v2817
      %2851 = vst.msk [vmem:[#allocation2 + $0x18] sm:$0xff] %vm2847, %v2818
      %2852 = vst.msk [vmem:[#allocation2 + $0x20] sm:$0xff] %vm2847, %v2819
      %2853 = vst.msk [vmem:[#allocation2 + $0x28] sm:$0xff] %vm2847, %v2820
      %2854 = vst.msk [vmem:[#allocation2 + $0x30] sm:$0xff] %vm2847, %v2821
      %2855 = vst.msk [vmem:[#allocation2 + $0x38] sm:$0xff] %vm2847, %v2822
      %2856 = vst.msk [vmem:[#allocation2 + $0x40] sm:$0xff] %vm2847, %v2823
      %2857 = vst.msk [vmem:[#allocation2 + $0x48] sm:$0xff] %vm2847, %v2824
      %2858 = vst.msk [vmem:[#allocation2 + $0x50] sm:$0xff] %vm2847, %v2825
      %2859 = vst.msk [vmem:[#allocation2 + $0x58] sm:$0xff] %vm2847, %v2826
      %2860 = vst.msk [vmem:[#allocation2 + $0x60] sm:$0xff] %vm2847, %v2827
      %2861 = vst.msk [vmem:[#allocation2 + $0x68] sm:$0xff] %vm2847, %v2828
      %2862 = vst.msk [vmem:[#allocation2 + $0x70] sm:$0xff] %vm2847, %v2829
      %2863 = vst.msk [vmem:[#allocation2 + $0x78] sm:$0xff] %vm2847, %v2830
      %2864 = vst.msk [vmem:[#allocation2 + $0x80] sm:$0xff] %vm2847, %v2831
      %2865 = vst.msk [vmem:[#allocation2 + $0x88] sm:$0xff] %vm2847, %v2832
      %2866 = vst.msk [vmem:[#allocation2 + $0x90] sm:$0xff] %vm2847, %v2833
      %2867 = vst.msk [vmem:[#allocation2 + $0x98] sm:$0xff] %vm2847, %v2834
      %2868 = vst.msk [vmem:[#allocation2 + $0xa0] sm:$0xff] %vm2847, %v2835
      %2869 = vst.msk [vmem:[#allocation2 + $0xa8] sm:$0xff] %vm2847, %v2836
      %2870 = vst.msk [vmem:[#allocation2 + $0xb0] sm:$0xff] %vm2847, %v2837
      %2871 = vst.msk [vmem:[#allocation2 + $0xb8] sm:$0xff] %vm2847, %v2838
      %2872 = vst.msk [vmem:[#allocation2 + $0xc0] sm:$0xff] %vm2847, %v2839
      %2873 = vst.msk [vmem:[#allocation2 + $0xc8] sm:$0xff] %vm2847, %v2840
      %2874 = vst.msk [vmem:[#allocation2 + $0xd0] sm:$0xff] %vm2847, %v2841
      %2875 = vst.msk [vmem:[#allocation2 + $0xd8] sm:$0xff] %vm2847, %v2842
      %2876 = vst.msk [vmem:[#allocation2 + $0xe0] sm:$0xff] %vm2847, %v2843
      %2877 = vst.msk [vmem:[#allocation2 + $0xe8] sm:$0xff] %vm2847, %v2844
      %2878 = vst.msk [vmem:[#allocation2 + $0xf0] sm:$0xff] %vm2847, %v2845
      %2879 = vst.msk [vmem:[#allocation2 + $0xf8] sm:$0xff] %vm2847, %v2846
      %p2880 = scmp.eq.s32.totalorder %s25, 1
      // Predicated region
      $region53: #{tpu_custom_call.1} parent=47 // pred_check
        %p2881 = pneg %p2880
      $region54: #{tpu_custom_call.1} parent=47 // pred_check_branch
        %2883 = sbr.rel (%p2881) target = $region56
      $region55: #{tpu_custom_call.1} parent=47 // pred_region
        %v2884 = vld [vmem:[#allocation2] sm:$0xff]
        %v2885 = vld [vmem:[#allocation2 + $0x8] sm:$0xff]
        %v2886 = vld [vmem:[#allocation2 + $0x10] sm:$0xff]
        %v2887 = vld [vmem:[#allocation2 + $0x18] sm:$0xff]
        %v2888 = vld [vmem:[#allocation2 + $0x20] sm:$0xff]
        %v2889 = vld [vmem:[#allocation2 + $0x28] sm:$0xff]
        %v2890 = vld [vmem:[#allocation2 + $0x30] sm:$0xff]
        %v2891 = vld [vmem:[#allocation2 + $0x38] sm:$0xff]
        %v2892 = vld [vmem:[#allocation2 + $0x40] sm:$0xff]
        %v2893 = vld [vmem:[#allocation2 + $0x48] sm:$0xff]
        %v2894 = vld [vmem:[#allocation2 + $0x50] sm:$0xff]
        %v2895 = vld [vmem:[#allocation2 + $0x58] sm:$0xff]
        %v2896 = vld [vmem:[#allocation2 + $0x60] sm:$0xff]
        %v2897 = vld [vmem:[#allocation2 + $0x68] sm:$0xff]
        %v2898 = vld [vmem:[#allocation2 + $0x70] sm:$0xff]
        %v2899 = vld [vmem:[#allocation2 + $0x78] sm:$0xff]
        %v2900 = vld [vmem:[#allocation2 + $0x80] sm:$0xff]
        %v2901 = vld [vmem:[#allocation2 + $0x88] sm:$0xff]
        %v2902 = vld [vmem:[#allocation2 + $0x90] sm:$0xff]
        %v2903 = vld [vmem:[#allocation2 + $0x98] sm:$0xff]
        %v2904 = vld [vmem:[#allocation2 + $0xa0] sm:$0xff]
        %v2905 = vld [vmem:[#allocation2 + $0xa8] sm:$0xff]
        %v2906 = vld [vmem:[#allocation2 + $0xb0] sm:$0xff]
        %v2907 = vld [vmem:[#allocation2 + $0xb8] sm:$0xff]
        %v2908 = vld [vmem:[#allocation2 + $0xc0] sm:$0xff]
        %v2909 = vld [vmem:[#allocation2 + $0xc8] sm:$0xff]
        %v2910 = vld [vmem:[#allocation2 + $0xd0] sm:$0xff]
        %v2911 = vld [vmem:[#allocation2 + $0xd8] sm:$0xff]
        %v2912 = vld [vmem:[#allocation2 + $0xe0] sm:$0xff]
        %v2913 = vld [vmem:[#allocation2 + $0xe8] sm:$0xff]
        %v2914 = vld [vmem:[#allocation2 + $0xf0] sm:$0xff]
        %v2915 = vld [vmem:[#allocation2 + $0xf8] sm:$0xff]
        %2916 = vst.msk [vmem:[%s370] sm:$0xff] %vm2847, %v2884
        %2917 = vst.msk [vmem:[%s370 + $0x8] sm:$0xff] %vm2847, %v2885
        %2918 = vst.msk [vmem:[%s370 + $0x10] sm:$0xff] %vm2847, %v2886
        %2919 = vst.msk [vmem:[%s370 + $0x18] sm:$0xff] %vm2847, %v2887
        %2920 = vst.msk [vmem:[%s370 + $0x20] sm:$0xff] %vm2847, %v2888
        %2921 = vst.msk [vmem:[%s370 + $0x28] sm:$0xff] %vm2847, %v2889
        %2922 = vst.msk [vmem:[%s370 + $0x30] sm:$0xff] %vm2847, %v2890
        %2923 = vst.msk [vmem:[%s370 + $0x38] sm:$0xff] %vm2847, %v2891
        %2924 = vst.msk [vmem:[%s370 + $0x40] sm:$0xff] %vm2847, %v2892
        %2925 = vst.msk [vmem:[%s370 + $0x48] sm:$0xff] %vm2847, %v2893
        %2926 = vst.msk [vmem:[%s370 + $0x50] sm:$0xff] %vm2847, %v2894
        %2927 = vst.msk [vmem:[%s370 + $0x58] sm:$0xff] %vm2847, %v2895
        %2928 = vst.msk [vmem:[%s370 + $0x60] sm:$0xff] %vm2847, %v2896
        %2929 = vst.msk [vmem:[%s370 + $0x68] sm:$0xff] %vm2847, %v2897
        %2930 = vst.msk [vmem:[%s370 + $0x70] sm:$0xff] %vm2847, %v2898
        %2931 = vst.msk [vmem:[%s370 + $0x78] sm:$0xff] %vm2847, %v2899
        %2932 = vst.msk [vmem:[%s370 + $0x80] sm:$0xff] %vm2847, %v2900
        %2933 = vst.msk [vmem:[%s370 + $0x88] sm:$0xff] %vm2847, %v2901
        %2934 = vst.msk [vmem:[%s370 + $0x90] sm:$0xff] %vm2847, %v2902
        %2935 = vst.msk [vmem:[%s370 + $0x98] sm:$0xff] %vm2847, %v2903
        %2936 = vst.msk [vmem:[%s370 + $0xa0] sm:$0xff] %vm2847, %v2904
        %2937 = vst.msk [vmem:[%s370 + $0xa8] sm:$0xff] %vm2847, %v2905
        %2938 = vst.msk [vmem:[%s370 + $0xb0] sm:$0xff] %vm2847, %v2906
        %2939 = vst.msk [vmem:[%s370 + $0xb8] sm:$0xff] %vm2847, %v2907
        %2940 = vst.msk [vmem:[%s370 + $0xc0] sm:$0xff] %vm2847, %v2908
        %2941 = vst.msk [vmem:[%s370 + $0xc8] sm:$0xff] %vm2847, %v2909
        %2942 = vst.msk [vmem:[%s370 + $0xd0] sm:$0xff] %vm2847, %v2910
        %2943 = vst.msk [vmem:[%s370 + $0xd8] sm:$0xff] %vm2847, %v2911
        %2944 = vst.msk [vmem:[%s370 + $0xe0] sm:$0xff] %vm2847, %v2912
        %2945 = vst.msk [vmem:[%s370 + $0xe8] sm:$0xff] %vm2847, %v2913
        %2946 = vst.msk [vmem:[%s370 + $0xf0] sm:$0xff] %vm2847, %v2914
        %2947 = vst.msk [vmem:[%s370 + $0xf8] sm:$0xff] %vm2847, %v2915
      $region56: #{tpu_custom_call.1} parent=47 // pred_fallthru
        _
      %s2948 = smul.u32 32, %s24
      %p2949 = scmp.lt.s32.totalorder %s23, 1
      %s2950 = scalar_select %p2949, %s23, 1
      %p2951 = scmp.lt.s32.totalorder %s2948, 63
      %s2952 = scalar_select %p2951, %s2948, 63
      %s2953 = smul.addr %s2950, 64
      %s2954 = sadd.s32 %s2952, %s2953
      %s2955 = smul.addr %s2954, 8
      %s2956 = scalar_lea.vmem %s7, %s2955
      // Predicated region
      $region57: #{tpu_custom_call.1} parent=47 // pred_check
        %p2957 = pneg %p221
      $region58: #{tpu_custom_call.1} parent=47 // pred_check_branch
        %2959 = sbr.rel (%p2957) target = $region60
      $region59: #{tpu_custom_call.1} parent=47 // pred_region
        %s2960 = smul.u32 32, %s24
      $region60: #{tpu_custom_call.1} parent=47 // pred_fallthru
        _
    $region48: #{tpu_custom_call.1} parent=5 // pred_fallthru
      _
    %p2961 = scmp.le.s32.totalorder 2, %s13
    // Predicated region
    $region61: #{tpu_custom_call.1} parent=5 // pred_check
      %p2962 = pneg %p2961
    $region62: #{tpu_custom_call.1} parent=5 // pred_check_branch
      %2964 = sbr.rel (%p2962) target = $region64
    $region63: #{tpu_custom_call.1} parent=5 // pred_region
      %s2965 = ssub.s32 %s13, 2
      // Predicated region
      $region65: #{tpu_custom_call.1} parent=63 // pred_check
        %p2966 = pneg %p227
      $region66: #{tpu_custom_call.1} parent=63 // pred_check_branch
        %2968 = sbr.rel (%p2966) target = $region68
      $region67: #{tpu_custom_call.1} parent=63 // pred_region
        %s2969 = smul.u32 32, %s27
        %p2970 = scmp.lt.s32.totalorder %s26, 1
        %s2971 = scalar_select %p2970, %s26, 1
        %p2972 = scmp.lt.s32.totalorder %s2969, 63
        %s2973 = scalar_select %p2972, %s2969, 63
        %s2974 = smul.addr %s2971, 64
        %s2975 = sadd.s32 %s2973, %s2974
        %s2976 = smul.addr %s2975, 8
        %s2977 = scalar_lea.vmem %s7, %s2976
      $region68: #{tpu_custom_call.1} parent=63 // pred_fallthru
        _
    $region64: #{tpu_custom_call.1} parent=5 // pred_fallthru
      _
  $region6: #{tpu_custom_call.1} parent=0 // loop_footer
    %s17 = sadd.s32 1, %s13
  $region7: #{tpu_custom_call.1} parent=0 // loop_footer_branch
    %12 = sbr.rel target = $region3
  $region8: #{tpu_custom_call.1} parent=0 // loop_exit
    _

</llo_original>
